<compile_context>
chip_gen: v6e
topology: v6e:2x2x1
jax: 0.10.0
libtpu: 0.0.40
codegen_flags: <defaults>
</compile_context>

<pallas_src>
import functools

import jax
import jax.numpy as jnp
from jax.experimental import pallas as pl
from jax.experimental.pallas import tpu as pltpu


def _round_up(x, m):
    return ((x + m - 1) // m) * m


# ----------------------------------------------------------------------------
# Conv2d (valid, stride s) + bias + ReLU: one Pallas kernel per layer.
# Patches are assembled in VMEM from static slices of the phase-decomposed
# flat image; KH*KW partial matmuls are accumulated in f32.
# ----------------------------------------------------------------------------
def _conv_kernel(x_ref, w_ref, b_ref, o_ref, *, offsets, lout):
    # x_ref: (1, s*s, Hph*Wph, Cin) bf16   w_ref: (k*k, Cin, Cout) bf16
    # b_ref: (1, Cout) f32                 o_ref: (1, lout, Cout) bf16
    acc = None
    for idx, (p, off) in enumerate(offsets):
        patch = x_ref[0, p, off:off + lout, :]                    # (lout, Cin)
        part = jnp.dot(patch, w_ref[idx],
                       preferred_element_type=jnp.float32)        # (lout, Cout)
        acc = part if acc is None else acc + part
    acc = acc + b_ref[...]                                        # f32 epilogue
    o_ref[0] = jnp.maximum(acc, 0.0).astype(o_ref.dtype)


def conv2d_relu(x_img, w_oihw, bias, stride, valid_hw):
    """x_img: (N, Himg, Wimg, Cin) bf16 (columns >= valid width are don't-care).
    Returns (y_img (N, OH, Wph, Cout) bf16, (OH, OW))."""
    n, h_img, w_img, cin = x_img.shape
    hv, wv = valid_hw
    cout, cin2, kh, kw = w_oihw.shape
    assert cin2 == cin and kh == kw
    k, s = kh, stride
    oh = (hv - k) // s + 1
    ow = (wv - k) // s + 1
    wph = -(-w_img // s)                                   # ceil(Wimg / s)
    hph = max(-(-h_img // s), oh + (k - 1) // s + 1)       # + slack for slices

    # Stride-phase decomposition (same total bytes as the input + zero pad).
    phases = []
    for pi in range(s):
        for pj in range(s):
            ph = x_img[:, pi::s, pj::s, :]
            ph = jnp.pad(ph, ((0, 0), (0, hph - ph.shape[1]),
                              (0, wph - ph.shape[2]), (0, 0)))
            phases.append(ph.reshape(n, hph * wph, cin))
    xp = jnp.stack(phases, axis=1).astype(jnp.bfloat16)    # (N, s*s, Hph*Wph, Cin)

    # OIHW -> (k*k, Cin, Cout) matching the (i, j) unroll order below.
    wk = jnp.transpose(w_oihw, (2, 3, 1, 0)).reshape(k * k, cin, cout)
    wk = wk.astype(jnp.bfloat16)
    bvec = bias.reshape(1, cout).astype(jnp.float32)

    lout = oh * wph
    lp = hph * wph
    offsets = tuple(((i % s) * s + (j % s), (i // s) * wph + (j // s))
                    for i in range(k) for j in range(k))

    flops = 2 * n * lout * cin * cout * k * k
    bytes_accessed = int(xp.size * 2 + wk.size * 2 + bvec.size * 4
                         + n * lout * cout * 2)

    out = pl.pallas_call(
        functools.partial(_conv_kernel, offsets=offsets, lout=lout),
        out_shape=jax.ShapeDtypeStruct((n, lout, cout), jnp.bfloat16),
        grid=(n,),
        in_specs=[
            pl.BlockSpec((1, s * s, lp, cin), lambda b_: (b_, 0, 0, 0)),
            pl.BlockSpec((k * k, cin, cout), lambda b_: (0, 0, 0)),
            pl.BlockSpec((1, cout), lambda b_: (0, 0)),
        ],
        out_specs=pl.BlockSpec((1, lout, cout), lambda b_: (b_, 0, 0)),
        compiler_params=pltpu.CompilerParams(
            dimension_semantics=("parallel",),
            vmem_limit_bytes=32 * 1024 * 1024),
        cost_estimate=pl.CostEstimate(flops=flops, transcendentals=0,
                                      bytes_accessed=bytes_accessed),
    )(xp, wk, bvec)
    return out.reshape(n, oh, wph, cout), (oh, ow)


# ----------------------------------------------------------------------------
# Fused fc1(+ReLU) -> fc2(+bias) kernel, tiled over batch rows.
# ----------------------------------------------------------------------------
def _mlp_kernel(x_ref, w1_ref, b1_ref, w2_ref, b2_ref, o_ref):
    h = jnp.dot(x_ref[...], w1_ref[...], preferred_element_type=jnp.float32)
    h = jnp.maximum(h + b1_ref[...], 0.0)                         # f32 epilogue
    o = jnp.dot(h.astype(w2_ref.dtype), w2_ref[...],
                preferred_element_type=jnp.float32)
    o_ref[...] = o + b2_ref[...]


def fused_mlp(flat, w1, b1, w2, b2):
    """flat (M, F) bf16; w1 (F, H) bf16; b1 (1, H) f32; w2 (H, A) bf16; b2 (1, A) f32."""
    m, f = flat.shape
    hdim = w1.shape[1]
    adim = w2.shape[1]
    bm = min(128, _round_up(m, 8))
    mp = _round_up(m, bm)
    if mp != m:
        flat = jnp.pad(flat, ((0, mp - m), (0, 0)))

    flops = 2 * mp * f * hdim + 2 * mp * hdim * adim
    bytes_accessed = int(flat.size * 2 + w1.size * 2 + w2.size * 2
                         + (b1.size + b2.size) * 4 + mp * adim * 4)

    out = pl.pallas_call(
        _mlp_kernel,
        out_shape=jax.ShapeDtypeStruct((mp, adim), jnp.float32),
        grid=(mp // bm,),
        in_specs=[
            pl.BlockSpec((bm, f), lambda i: (i, 0)),
            pl.BlockSpec((f, hdim), lambda i: (0, 0)),
            pl.BlockSpec((1, hdim), lambda i: (0, 0)),
            pl.BlockSpec((hdim, adim), lambda i: (0, 0)),
            pl.BlockSpec((1, adim), lambda i: (0, 0)),
        ],
        out_specs=pl.BlockSpec((bm, adim), lambda i: (i, 0)),
        compiler_params=pltpu.CompilerParams(
            dimension_semantics=("parallel",),
            vmem_limit_bytes=32 * 1024 * 1024),
        cost_estimate=pl.CostEstimate(flops=flops, transcendentals=0,
                                      bytes_accessed=bytes_accessed),
    )(flat, w1, b1, w2, b2)
    return out[:m]


# ----------------------------------------------------------------------------
# Parameter prep: fold PyTorch's NCHW flatten (and the width-padding garbage
# drop) into fc1's weight rows; pad hidden/action dims to 128 lanes with zeros.
# ----------------------------------------------------------------------------
def _prep_fc_params(params, oh, ow, wph, cout):
    fc1_w, fc1_b = params["fc1_w"], params["fc1_b"]    # (cout*oh*ow, fc_dim)
    fc2_w, fc2_b = params["fc2_w"], params["fc2_b"]    # (fc_dim, n_actions)
    fc_dim = fc1_w.shape[1]
    n_actions = fc2_w.shape[1]

    y = jnp.arange(oh)[:, None, None]
    x = jnp.arange(wph)[None, :, None]
    c = jnp.arange(cout)[None, None, :]
    src = c * (oh * ow) + y * ow + jnp.minimum(x, ow - 1)           # (oh,wph,cout)
    valid = jnp.broadcast_to(x < ow, src.shape)
    rows = jnp.take(fc1_w, src.reshape(-1), axis=0)                 # (oh*wph*cout, fc_dim)
    w1_eff = jnp.where(valid.reshape(-1, 1), rows, 0.0)

    hpad = _round_up(fc_dim, 128)
    apad = _round_up(n_actions, 128)
    w1_eff = jnp.pad(w1_eff, ((0, 0), (0, hpad - fc_dim))).astype(jnp.bfloat16)
    b1_eff = jnp.pad(fc1_b, (0, hpad - fc_dim)).reshape(1, hpad).astype(jnp.float32)
    w2_eff = jnp.pad(fc2_w, ((0, hpad - fc_dim),
                             (0, apad - n_actions))).astype(jnp.bfloat16)
    b2_eff = jnp.pad(fc2_b, (0, apad - n_actions)).reshape(1, apad).astype(jnp.float32)
    return w1_eff, b1_eff, w2_eff, b2_eff, n_actions


# ----------------------------------------------------------------------------
# Full CNNTDNetwork forward
# ----------------------------------------------------------------------------
def cnn_td_forward(params, state_nchw):
    x = jnp.transpose(state_nchw, (0, 2, 3, 1)).astype(jnp.bfloat16)  # NCHW->NHWC
    n = x.shape[0]
    valid = (x.shape[1], x.shape[2])
    for (w, b, stride) in params["convs"]:
        x, valid = conv2d_relu(x, w, b, stride, valid)
    _, oh, wph, cout = x.shape
    ow = valid[1]
    w1, b1, w2, b2, n_actions = _prep_fc_params(params, oh, ow, wph, cout)
    flat = x.reshape(n, oh * wph * cout)                 # free reshape, bf16
    out = fused_mlp(flat, w1, b1, w2, b2)
    return out[:, :n_actions]


# Pure-JAX reference (correctness check only)
def reference_forward(params, state_nchw):
    x = state_nchw
    for (w, b, stride) in params["convs"]:
        x = jax.lax.conv_general_dilated(
            x, w, (stride, stride), "VALID",
            dimension_numbers=("NCHW", "OIHW", "NCHW"))
        x = jax.nn.relu(x + b.reshape(1, -1, 1, 1))
    flat = x.reshape(x.shape[0], -1)
    h = jax.nn.relu(flat @ params["fc1_w"] + params["fc1_b"])
    return h @ params["fc2_w"] + params["fc2_b"]


def make_params(key, input_dims, cnn_dims, fc_dim, n_actions):
    convs = []
    in_c = input_dims[0]
    h, w = input_dims[1], input_dims[2]
    for (out_c, k, s) in cnn_dims:
        key, kw_, kb_ = jax.random.split(key, 3)
        wgt = jax.random.normal(kw_, (out_c, in_c, k, k), jnp.float32) * 0.1
        bias = jax.random.normal(kb_, (out_c,), jnp.float32) * 0.1
        convs.append((wgt, bias, s))
        h = (h - k) // s + 1
        w = (w - k) // s + 1
        in_c = out_c
    total_fc_in = in_c * h * w
    key, k1, k2, k3, k4 = jax.random.split(key, 5)
    return {
        "convs": convs,
        "fc1_w": jax.random.normal(k1, (total_fc_in, fc_dim), jnp.float32) * 0.05,
        "fc1_b": jax.random.normal(k2, (fc_dim,), jnp.float32) * 0.05,
        "fc2_w": jax.random.normal(k3, (fc_dim, n_actions), jnp.float32) * 0.05,
        "fc2_b": jax.random.normal(k4, (n_actions,), jnp.float32) * 0.05,
    }


def _bf16_round(tree):
    def f(a):
        if hasattr(a, "dtype") and a.dtype == jnp.float32:
            return a.astype(jnp.bfloat16).astype(jnp.float32)
        return a
    return jax.tree_util.tree_map(f, tree)


if __name__ == "__main__":
    batch = 2
    input_dims = (4, 16, 16)
    cnn_dims = [[8, 3, 1], [16, 3, 2]]   # [out_channels, kernel, stride]
    fc_dim = 32
    n_actions = 6

    key = jax.random.PRNGKey(0)
    key, kx = jax.random.split(key)
    params = make_params(key, input_dims, cnn_dims, fc_dim, n_actions)
    state = jax.random.normal(kx, (batch,) + input_dims, jnp.float32)

    # Round params/input to bf16 once so the f32 reference and the bf16 kernel
    # path see identical values (remaining diff = bf16 intermediate rounding).
    params = _bf16_round(params)
    state = _bf16_round(state)

    out = jax.block_until_ready(cnn_td_forward(params, state))
    ref = jax.block_until_ready(reference_forward(params, state))

    assert out.shape == (batch, n_actions)
    max_err = float(jnp.max(jnp.abs(out - ref)))
    assert jnp.allclose(out, ref, rtol=2e-2, atol=2e-2), f"mismatch: {max_err}"

    # TODO(synk): optimizer / loss / save_model-load_model are training-side
    # utilities with no forward-pass compute, so they are not translated.
    print("KERNEL_OK")
</pallas_src>

<mosaic_0001>
module attributes {stable_mosaic.version = 11 : i64} {
  func.func @_conv_kernel(%arg0: i32, %arg1: memref<1x1x272x4xbf16, #tpu.memory_space<vmem>>, %arg2: memref<9x4x8xbf16, #tpu.memory_space<vmem>>, %arg3: memref<1x8xf32, #tpu.memory_space<vmem>>, %arg4: memref<1x224x8xbf16, #tpu.memory_space<vmem>>) attributes {dimension_semantics = [#tpu.dimension_semantics<parallel>], iteration_bounds = array<i64: 2>, scalar_prefetch = 0 : i64, scratch_operands = 0 : i64, tpu.core_type = #tpu.core_type<tc>, window_params = [{transform_indices = @transform_0, window_bounds = array<i64: 1, 1, 272, 4>}, {pipeline_mode = #tpu.pipeline_mode<synchronous>, transform_indices = @transform_1, window_bounds = array<i64: 9, 4, 8>}, {pipeline_mode = #tpu.pipeline_mode<synchronous>, transform_indices = @transform_2, window_bounds = array<i64: 1, 8>}, {transform_indices = @transform_3, window_bounds = array<i64: 1, 224, 8>}]} {
    %c0 = arith.constant 0 : index
    %c0_0 = arith.constant 0 : index
    %c0_1 = arith.constant 0 : index
    %c0_2 = arith.constant 0 : index
    %0 = vector.load %arg1[%c0, %c0_0, %c0_1, %c0_2] : memref<1x1x272x4xbf16, #tpu.memory_space<vmem>>, vector<1x1x224x4xbf16>
    %1 = vector.shape_cast %0 : vector<1x1x224x4xbf16> to vector<224x4xbf16>
    %c0_3 = arith.constant 0 : index
    %c0_4 = arith.constant 0 : index
    %c0_5 = arith.constant 0 : index
    %2 = vector.load %arg2[%c0_3, %c0_4, %c0_5] : memref<9x4x8xbf16, #tpu.memory_space<vmem>>, vector<1x4x8xbf16>
    %3 = vector.shape_cast %2 : vector<1x4x8xbf16> to vector<4x8xbf16>
    %cst = arith.constant dense<0.000000e+00> : vector<224x8xf32>
    %4 = tpu.matmul %1, %3, %cst {dimension_numbers = #tpu.dot_dimension_numbers<[1], [0], [0], [1], [0, 0, 1, 1], [], []>} : vector<224x4xbf16>, vector<4x8xbf16>, vector<224x8xf32> -> vector<224x8xf32>
    %c0_6 = arith.constant 0 : index
    %c0_7 = arith.constant 0 : index
    %c1 = arith.constant 1 : index
    %c0_8 = arith.constant 0 : index
    %5 = vector.load %arg1[%c0_6, %c0_7, %c1, %c0_8] : memref<1x1x272x4xbf16, #tpu.memory_space<vmem>>, vector<1x1x224x4xbf16>
    %6 = vector.shape_cast %5 : vector<1x1x224x4xbf16> to vector<224x4xbf16>
    %c1_9 = arith.constant 1 : index
    %c0_10 = arith.constant 0 : index
    %c0_11 = arith.constant 0 : index
    %7 = vector.load %arg2[%c1_9, %c0_10, %c0_11] : memref<9x4x8xbf16, #tpu.memory_space<vmem>>, vector<1x4x8xbf16>
    %8 = vector.shape_cast %7 : vector<1x4x8xbf16> to vector<4x8xbf16>
    %cst_12 = arith.constant dense<0.000000e+00> : vector<224x8xf32>
    %9 = tpu.matmul %6, %8, %cst_12 {dimension_numbers = #tpu.dot_dimension_numbers<[1], [0], [0], [1], [0, 0, 1, 1], [], []>} : vector<224x4xbf16>, vector<4x8xbf16>, vector<224x8xf32> -> vector<224x8xf32>
    %10 = arith.addf %4, %9 : vector<224x8xf32>
    %c0_13 = arith.constant 0 : index
    %c0_14 = arith.constant 0 : index
    %c2 = arith.constant 2 : index
    %c0_15 = arith.constant 0 : index
    %11 = vector.load %arg1[%c0_13, %c0_14, %c2, %c0_15] : memref<1x1x272x4xbf16, #tpu.memory_space<vmem>>, vector<1x1x224x4xbf16>
    %12 = vector.shape_cast %11 : vector<1x1x224x4xbf16> to vector<224x4xbf16>
    %c2_16 = arith.constant 2 : index
    %c0_17 = arith.constant 0 : index
    %c0_18 = arith.constant 0 : index
    %13 = vector.load %arg2[%c2_16, %c0_17, %c0_18] : memref<9x4x8xbf16, #tpu.memory_space<vmem>>, vector<1x4x8xbf16>
    %14 = vector.shape_cast %13 : vector<1x4x8xbf16> to vector<4x8xbf16>
    %cst_19 = arith.constant dense<0.000000e+00> : vector<224x8xf32>
    %15 = tpu.matmul %12, %14, %cst_19 {dimension_numbers = #tpu.dot_dimension_numbers<[1], [0], [0], [1], [0, 0, 1, 1], [], []>} : vector<224x4xbf16>, vector<4x8xbf16>, vector<224x8xf32> -> vector<224x8xf32>
    %16 = arith.addf %10, %15 : vector<224x8xf32>
    %c0_20 = arith.constant 0 : index
    %c0_21 = arith.constant 0 : index
    %c16 = arith.constant 16 : index
    %c0_22 = arith.constant 0 : index
    %17 = vector.load %arg1[%c0_20, %c0_21, %c16, %c0_22] : memref<1x1x272x4xbf16, #tpu.memory_space<vmem>>, vector<1x1x224x4xbf16>
    %18 = vector.shape_cast %17 : vector<1x1x224x4xbf16> to vector<224x4xbf16>
    %c3 = arith.constant 3 : index
    %c0_23 = arith.constant 0 : index
    %c0_24 = arith.constant 0 : index
    %19 = vector.load %arg2[%c3, %c0_23, %c0_24] : memref<9x4x8xbf16, #tpu.memory_space<vmem>>, vector<1x4x8xbf16>
    %20 = vector.shape_cast %19 : vector<1x4x8xbf16> to vector<4x8xbf16>
    %cst_25 = arith.constant dense<0.000000e+00> : vector<224x8xf32>
    %21 = tpu.matmul %18, %20, %cst_25 {dimension_numbers = #tpu.dot_dimension_numbers<[1], [0], [0], [1], [0, 0, 1, 1], [], []>} : vector<224x4xbf16>, vector<4x8xbf16>, vector<224x8xf32> -> vector<224x8xf32>
    %22 = arith.addf %16, %21 : vector<224x8xf32>
    %c0_26 = arith.constant 0 : index
    %c0_27 = arith.constant 0 : index
    %c17 = arith.constant 17 : index
    %c0_28 = arith.constant 0 : index
    %23 = vector.load %arg1[%c0_26, %c0_27, %c17, %c0_28] : memref<1x1x272x4xbf16, #tpu.memory_space<vmem>>, vector<1x1x224x4xbf16>
    %24 = vector.shape_cast %23 : vector<1x1x224x4xbf16> to vector<224x4xbf16>
    %c4 = arith.constant 4 : index
    %c0_29 = arith.constant 0 : index
    %c0_30 = arith.constant 0 : index
    %25 = vector.load %arg2[%c4, %c0_29, %c0_30] : memref<9x4x8xbf16, #tpu.memory_space<vmem>>, vector<1x4x8xbf16>
    %26 = vector.shape_cast %25 : vector<1x4x8xbf16> to vector<4x8xbf16>
    %cst_31 = arith.constant dense<0.000000e+00> : vector<224x8xf32>
    %27 = tpu.matmul %24, %26, %cst_31 {dimension_numbers = #tpu.dot_dimension_numbers<[1], [0], [0], [1], [0, 0, 1, 1], [], []>} : vector<224x4xbf16>, vector<4x8xbf16>, vector<224x8xf32> -> vector<224x8xf32>
    %28 = arith.addf %22, %27 : vector<224x8xf32>
    %c0_32 = arith.constant 0 : index
    %c0_33 = arith.constant 0 : index
    %c18 = arith.constant 18 : index
    %c0_34 = arith.constant 0 : index
    %29 = vector.load %arg1[%c0_32, %c0_33, %c18, %c0_34] : memref<1x1x272x4xbf16, #tpu.memory_space<vmem>>, vector<1x1x224x4xbf16>
    %30 = vector.shape_cast %29 : vector<1x1x224x4xbf16> to vector<224x4xbf16>
    %c5 = arith.constant 5 : index
    %c0_35 = arith.constant 0 : index
    %c0_36 = arith.constant 0 : index
    %31 = vector.load %arg2[%c5, %c0_35, %c0_36] : memref<9x4x8xbf16, #tpu.memory_space<vmem>>, vector<1x4x8xbf16>
    %32 = vector.shape_cast %31 : vector<1x4x8xbf16> to vector<4x8xbf16>
    %cst_37 = arith.constant dense<0.000000e+00> : vector<224x8xf32>
    %33 = tpu.matmul %30, %32, %cst_37 {dimension_numbers = #tpu.dot_dimension_numbers<[1], [0], [0], [1], [0, 0, 1, 1], [], []>} : vector<224x4xbf16>, vector<4x8xbf16>, vector<224x8xf32> -> vector<224x8xf32>
    %34 = arith.addf %28, %33 : vector<224x8xf32>
    %c0_38 = arith.constant 0 : index
    %c0_39 = arith.constant 0 : index
    %c32 = arith.constant 32 : index
    %c0_40 = arith.constant 0 : index
    %35 = vector.load %arg1[%c0_38, %c0_39, %c32, %c0_40] : memref<1x1x272x4xbf16, #tpu.memory_space<vmem>>, vector<1x1x224x4xbf16>
    %36 = vector.shape_cast %35 : vector<1x1x224x4xbf16> to vector<224x4xbf16>
    %c6 = arith.constant 6 : index
    %c0_41 = arith.constant 0 : index
    %c0_42 = arith.constant 0 : index
    %37 = vector.load %arg2[%c6, %c0_41, %c0_42] : memref<9x4x8xbf16, #tpu.memory_space<vmem>>, vector<1x4x8xbf16>
    %38 = vector.shape_cast %37 : vector<1x4x8xbf16> to vector<4x8xbf16>
    %cst_43 = arith.constant dense<0.000000e+00> : vector<224x8xf32>
    %39 = tpu.matmul %36, %38, %cst_43 {dimension_numbers = #tpu.dot_dimension_numbers<[1], [0], [0], [1], [0, 0, 1, 1], [], []>} : vector<224x4xbf16>, vector<4x8xbf16>, vector<224x8xf32> -> vector<224x8xf32>
    %40 = arith.addf %34, %39 : vector<224x8xf32>
    %c0_44 = arith.constant 0 : index
    %c0_45 = arith.constant 0 : index
    %c33 = arith.constant 33 : index
    %c0_46 = arith.constant 0 : index
    %41 = vector.load %arg1[%c0_44, %c0_45, %c33, %c0_46] : memref<1x1x272x4xbf16, #tpu.memory_space<vmem>>, vector<1x1x224x4xbf16>
    %42 = vector.shape_cast %41 : vector<1x1x224x4xbf16> to vector<224x4xbf16>
    %c7 = arith.constant 7 : index
    %c0_47 = arith.constant 0 : index
    %c0_48 = arith.constant 0 : index
    %43 = vector.load %arg2[%c7, %c0_47, %c0_48] : memref<9x4x8xbf16, #tpu.memory_space<vmem>>, vector<1x4x8xbf16>
    %44 = vector.shape_cast %43 : vector<1x4x8xbf16> to vector<4x8xbf16>
    %cst_49 = arith.constant dense<0.000000e+00> : vector<224x8xf32>
    %45 = tpu.matmul %42, %44, %cst_49 {dimension_numbers = #tpu.dot_dimension_numbers<[1], [0], [0], [1], [0, 0, 1, 1], [], []>} : vector<224x4xbf16>, vector<4x8xbf16>, vector<224x8xf32> -> vector<224x8xf32>
    %46 = arith.addf %40, %45 : vector<224x8xf32>
    %c0_50 = arith.constant 0 : index
    %c0_51 = arith.constant 0 : index
    %c34 = arith.constant 34 : index
    %c0_52 = arith.constant 0 : index
    %47 = vector.load %arg1[%c0_50, %c0_51, %c34, %c0_52] : memref<1x1x272x4xbf16, #tpu.memory_space<vmem>>, vector<1x1x224x4xbf16>
    %48 = vector.shape_cast %47 : vector<1x1x224x4xbf16> to vector<224x4xbf16>
    %c8 = arith.constant 8 : index
    %c0_53 = arith.constant 0 : index
    %c0_54 = arith.constant 0 : index
    %49 = vector.load %arg2[%c8, %c0_53, %c0_54] : memref<9x4x8xbf16, #tpu.memory_space<vmem>>, vector<1x4x8xbf16>
    %50 = vector.shape_cast %49 : vector<1x4x8xbf16> to vector<4x8xbf16>
    %cst_55 = arith.constant dense<0.000000e+00> : vector<224x8xf32>
    %51 = tpu.matmul %48, %50, %cst_55 {dimension_numbers = #tpu.dot_dimension_numbers<[1], [0], [0], [1], [0, 0, 1, 1], [], []>} : vector<224x4xbf16>, vector<4x8xbf16>, vector<224x8xf32> -> vector<224x8xf32>
    %52 = arith.addf %46, %51 : vector<224x8xf32>
    %c0_56 = arith.constant 0 : index
    %c0_57 = arith.constant 0 : index
    %53 = vector.load %arg3[%c0_56, %c0_57] : memref<1x8xf32, #tpu.memory_space<vmem>>, vector<1x8xf32>
    %54 = vector.broadcast %53 : vector<1x8xf32> to vector<224x8xf32>
    %55 = arith.addf %52, %54 : vector<224x8xf32>
    %cst_58 = arith.constant 0.000000e+00 : f32
    %56 = vector.broadcast %cst_58 : f32 to vector<224x8xf32>
    %57 = arith.maximumf %55, %56 : vector<224x8xf32>
    %58 = arith.truncf %57 : vector<224x8xf32> to vector<224x8xbf16>
    %c0_59 = arith.constant 0 : index
    %c0_60 = arith.constant 0 : index
    %c0_61 = arith.constant 0 : index
    %59 = vector.load %arg4[%c0_59, %c0_60, %c0_61] : memref<1x224x8xbf16, #tpu.memory_space<vmem>>, vector<1x224x8xbf16>
    %60 = vector.shape_cast %59 : vector<1x224x8xbf16> to vector<224x8xbf16>
    %61 = vector.shape_cast %58 : vector<224x8xbf16> to vector<1x224x8xbf16>
    tpu.vector_store %arg4[%c0_59, %c0_60, %c0_61], %61 {strides = array<i32>} : memref<1x224x8xbf16, #tpu.memory_space<vmem>>, vector<1x224x8xbf16>,
    return
  }
  func.func @transform_0(%arg0: i32) -> (i32, i32, i32, i32) {
    %c0_i32 = arith.constant 0 : i32
    %c0_i32_0 = arith.constant 0 : i32
    %c0_i32_1 = arith.constant 0 : i32
    %c0_i32_2 = arith.constant 0 : i32
    return %arg0, %c0_i32, %c0_i32_0, %c0_i32_1 : i32, i32, i32, i32
  }
  func.func @transform_1(%arg0: i32) -> (i32, i32, i32) {
    %c0_i32 = arith.constant 0 : i32
    %c0_i32_0 = arith.constant 0 : i32
    %c0_i32_1 = arith.constant 0 : i32
    %c0_i32_2 = arith.constant 0 : i32
    return %c0_i32, %c0_i32_0, %c0_i32_1 : i32, i32, i32
  }
  func.func @transform_2(%arg0: i32) -> (i32, i32) {
    %c0_i32 = arith.constant 0 : i32
    %c0_i32_0 = arith.constant 0 : i32
    %c0_i32_1 = arith.constant 0 : i32
    return %c0_i32, %c0_i32_0 : i32, i32
  }
  func.func @transform_3(%arg0: i32) -> (i32, i32, i32) {
    %c0_i32 = arith.constant 0 : i32
    %c0_i32_0 = arith.constant 0 : i32
    %c0_i32_1 = arith.constant 0 : i32
    return %arg0, %c0_i32, %c0_i32_0 : i32, i32, i32
  }
}

</mosaic_0001>

<llo_original>
// kernel: tpu_custom_call.1
$region0: #{tpu_custom_call.1}
  #allocation0 [shape = 'u32[]', space=smem, size = 0x4, offset = 0x4, fixed_abs, tag = 'smem constant byte address 0x4 - core index']
  #allocation1 [shape = 'u32[144,128]{1,0:T(1,128)}', space=vmem, size = 0x12000, scoped, tag = 'internal scratch']
  %s0 = inlined_call_operand.vmem [shape: bf16[2,1,272,4], index: 0, kind: input, shape index: {}]
  %s1 = inlined_call_operand.vmem [shape: bf16[9,4,8], index: 1, kind: input, shape index: {}]
  %s2 = inlined_call_operand.vmem [shape: f32[1,8], index: 2, kind: input, shape index: {}]
  %s3 = inlined_call_operand.vmem [shape: bf16[2,224,8], index: 3, kind: output, shape index: {}]
  %s4 = sld [smem:[#allocation0]]
  $region45: #{tpu_custom_call.1} parent=0
    _
  %s6 = ssub.s32 1, %s4
  %s7 = scalar_select 0, %s6, %s4
  loop: start=0, step=1, limit=4
  $region2: #{tpu_custom_call.1} parent=0 // loop_pre_header
    _
  $region3: #{tpu_custom_call.1} parent=0 // loop_header
    %s9 = sphi 0, %s13
    %p10 = scmp.ge.s32.totalorder %s9, 4
    %s19 = sphi 0, %s21
    %s22 = sphi 0, %s19
    %s23 = sphi 0, %s22
    %s39 = sphi 0, %s23
    %s43 = sphi 0, %s43
    %s45 = sphi 0, %s43
    %s46 = sphi 0, %s45
    %s60 = sphi 0, %s46
    %s64 = sphi 0, %s64
    %s66 = sphi 0, %s64
    %s67 = sphi 0, %s66
    %s81 = sphi 0, %s67
    %s87 = sphi 0, %s89
    %s90 = sphi 0, %s87
    %s91 = sphi 0, %s90
    %s107 = sphi 0, %s91
  $region4: #{tpu_custom_call.1} parent=0 // loop_header_branch
    %12 = sbr.rel (%p10) target = $region8
  $region5: #{tpu_custom_call.1} parent=0 // loop_body
    %s14 = ssub.s32 %s9, 1
    %s15 = ssub.s32 %s9, 2
    %s16 = sadd.s32 %s9, 1
    %s17 = ssub.s32 %s9, %s16
    %p18 = scmp.eq.s32.totalorder %s17, 0
    %s20 = sadd.s32 %s19, 1
    %s21 = scalar_select %p18, %s19, %s20
    %p24 = pneg %p18
    %p25 = scmp.eq.s32.totalorder %s9, 1
    %p26 = por %p24, %p25
    %p27 = scmp.ne.s32.totalorder %s19, %s22
    %p28 = scmp.eq.s32.totalorder %s9, 0
    %p29 = por %p27, %p28
    %p30 = scmp.ne.s32.totalorder %s19, %s22
    %p31 = scmp.eq.s32.totalorder %s14, 1
    %p32 = por %p30, %p31
    %p33 = scmp.ne.s32.totalorder %s22, %s23
    %p34 = scmp.eq.s32.totalorder %s14, 0
    %p35 = por %p33, %p34
    %p36 = scmp.ne.s32.totalorder %s22, %s23
    %p37 = scmp.eq.s32.totalorder %s15, 1
    %p38 = por %p36, %p37
    %p40 = scmp.ne.s32.totalorder %s23, %s39
    %p41 = scmp.eq.s32.totalorder %s15, 0
    %p42 = por %p40, %p41
    %s44 = sadd.s32 %s43, 1
    %p47 = scmp.eq.s32.totalorder %s9, 1
    %p48 = scmp.ne.s32.totalorder %s43, %s45
    %p49 = scmp.eq.s32.totalorder %s9, 0
    %p50 = por %p48, %p49
    %p51 = scmp.ne.s32.totalorder %s43, %s45
    %p52 = scmp.eq.s32.totalorder %s14, 1
    %p53 = por %p51, %p52
    %p54 = scmp.ne.s32.totalorder %s45, %s46
    %p55 = scmp.eq.s32.totalorder %s14, 0
    %p56 = por %p54, %p55
    %p57 = scmp.ne.s32.totalorder %s45, %s46
    %p58 = scmp.eq.s32.totalorder %s15, 1
    %p59 = por %p57, %p58
    %p61 = scmp.ne.s32.totalorder %s46, %s60
    %p62 = scmp.eq.s32.totalorder %s15, 0
    %p63 = por %p61, %p62
    %s65 = sadd.s32 %s64, 1
    %p68 = scmp.eq.s32.totalorder %s9, 1
    %p69 = scmp.ne.s32.totalorder %s64, %s66
    %p70 = scmp.eq.s32.totalorder %s9, 0
    %p71 = por %p69, %p70
    %p72 = scmp.ne.s32.totalorder %s64, %s66
    %p73 = scmp.eq.s32.totalorder %s14, 1
    %p74 = por %p72, %p73
    %p75 = scmp.ne.s32.totalorder %s66, %s67
    %p76 = scmp.eq.s32.totalorder %s14, 0
    %p77 = por %p75, %p76
    %p78 = scmp.ne.s32.totalorder %s66, %s67
    %p79 = scmp.eq.s32.totalorder %s15, 1
    %p80 = por %p78, %p79
    %p82 = scmp.ne.s32.totalorder %s67, %s81
    %p83 = scmp.eq.s32.totalorder %s15, 0
    %p84 = por %p82, %p83
    %s85 = ssub.s32 %s9, %s16
    %p86 = scmp.eq.s32.totalorder %s85, 0
    %s88 = sadd.s32 %s87, 1
    %s89 = scalar_select %p86, %s87, %s88
    %p92 = pneg %p86
    %p93 = scmp.eq.s32.totalorder %s9, 1
    %p94 = por %p92, %p93
    %p95 = scmp.ne.s32.totalorder %s87, %s90
    %p96 = scmp.eq.s32.totalorder %s9, 0
    %p97 = por %p95, %p96
    %p98 = scmp.ne.s32.totalorder %s87, %s90
    %p99 = scmp.eq.s32.totalorder %s14, 1
    %p100 = por %p98, %p99
    %p101 = scmp.ne.s32.totalorder %s90, %s91
    %p102 = scmp.eq.s32.totalorder %s14, 0
    %p103 = por %p101, %p102
    %p104 = scmp.ne.s32.totalorder %s90, %s91
    %p105 = scmp.eq.s32.totalorder %s15, 1
    %p106 = por %p104, %p105
    %p108 = scmp.ne.s32.totalorder %s91, %s107
    %p109 = scmp.eq.s32.totalorder %s15, 0
    %p110 = por %p108, %p109
    %p111 = scmp.le.s32.totalorder 1, %s9
    %p112 = scmp.lt.s32.totalorder %s9, 3
    %p113 = pnand %p111, %p112
    %p114 = pneg %p113
    // Predicated region
    $region9: #{tpu_custom_call.1} parent=5 // pred_check
      _
    $region10: #{tpu_custom_call.1} parent=5 // pred_check_branch
      %116 = sbr.rel (%p113) target = $region12
    $region11: #{tpu_custom_call.1} parent=5 // pred_region
      %s117 = ssub.s32 %s9, 1
      // Predicated region
      $region13: #{tpu_custom_call.1} parent=11 // pred_check
        %p118 = pneg %p56
      $region14: #{tpu_custom_call.1} parent=11 // pred_check_branch
        %120 = sbr.rel (%p118) target = $region16
      $region15: #{tpu_custom_call.1} parent=11 // pred_region
        _
      $region16: #{tpu_custom_call.1} parent=11 // pred_fallthru
        _
      // Predicated region
      $region17: #{tpu_custom_call.1} parent=11 // pred_check
        %p121 = pneg %p77
      $region18: #{tpu_custom_call.1} parent=11 // pred_check_branch
        %123 = sbr.rel (%p121) target = $region20
      $region19: #{tpu_custom_call.1} parent=11 // pred_region
        _
      $region20: #{tpu_custom_call.1} parent=11 // pred_fallthru
        _
    $region12: #{tpu_custom_call.1} parent=5 // pred_fallthru
      _
    %p124 = scmp.lt.s32.totalorder %s9, 2
    // Predicated region
    $region21: #{tpu_custom_call.1} parent=5 // pred_check
      %p125 = pneg %p124
    $region22: #{tpu_custom_call.1} parent=5 // pred_check_branch
      %127 = sbr.rel (%p125) target = $region24
    $region23: #{tpu_custom_call.1} parent=5 // pred_region
      // Predicated region
      $region25: #{tpu_custom_call.1} parent=23 // pred_check
        %p128 = pneg %p29
      $region26: #{tpu_custom_call.1} parent=23 // pred_check_branch
        %130 = sbr.rel (%p128) target = $region28
      $region27: #{tpu_custom_call.1} parent=23 // pred_region
        %p131 = scmp.lt.s32.totalorder %s9, 1
        %s132 = scalar_select %p131, %s9, 1
        %s133 = smul.addr %s132, 34
        %s134 = smul.addr %s133, 4
        %s135 = scalar_lea.vmem %s0, %s134
      $region28: #{tpu_custom_call.1} parent=23 // pred_fallthru
        _
    $region24: #{tpu_custom_call.1} parent=5 // pred_fallthru
      _
    %p136 = scmp.le.s32.totalorder 1, %s9
    %p137 = scmp.lt.s32.totalorder %s9, 3
    %p138 = pnand %p136, %p137
    %p139 = pneg %p138
    // Predicated region
    $region29: #{tpu_custom_call.1} parent=5 // pred_check
      _
    $region30: #{tpu_custom_call.1} parent=5 // pred_check_branch
      %141 = sbr.rel (%p138) target = $region32
    $region31: #{tpu_custom_call.1} parent=5 // pred_region
      %s142 = ssub.s32 %s9, 1
      %p143 = scmp.lt.s32.totalorder %s14, 1
      %s144 = scalar_select %p143, %s14, 1
      %s145 = smul.addr %s144, 34
      %s146 = smul.addr %s145, 4
      %s147 = scalar_lea.vmem %s0, %s146
      %p148 = pneg %p35
      %p149 = pneg %p32
      %p150 = pneg %p56
      %p151 = pneg %p53
      %p152 = pneg %p77
      %p153 = pneg %p74
      %p154 = pneg %p103
      %p155 = pneg %p100
      %p156 = scmp.lt.s32.totalorder %s14, 1
      %s157 = scalar_select %p156, %s14, 1
      %s158 = smul.addr %s157, 28
      %s159 = smul.addr %s158, 4
      %s160 = scalar_lea.vmem %s3, %s159
      %p161 = scmp.lt.s32.totalorder %s14, 1
      %s162 = scalar_select %p161, %s14, 1
      %s163 = smul.addr %s162, 34
      %s164 = smul.addr %s163, 4
      %s165 = scalar_lea.vmem %s0, %s164
      %p166 = scmp.lt.s32.totalorder %s14, 1
      %s167 = scalar_select %p166, %s14, 1
      %s168 = smul.addr %s167, 28
      %s169 = smul.addr %s168, 4
      %s170 = scalar_lea.vmem %s3, %s169
      %v172 = vld [vmem:[%s165] sm:$0xf]
      %v173 = vld [vmem:[%s165 + $0x4] sm:$0xf]
      %v174 = vld [vmem:[%s165 + $0x8] sm:$0xf]
      %v175 = vld [vmem:[%s165 + $0xc] sm:$0xf]
      %v176 = vld [vmem:[%s165 + $0x10] sm:$0xf]
      %v177 = vld [vmem:[%s165 + $0x14] sm:$0xf]
      %v178 = vld [vmem:[%s165 + $0x18] sm:$0xf]
      %v179 = vld [vmem:[%s165 + $0x1c] sm:$0xf]
      %v180 = vld [vmem:[%s165 + $0x20] sm:$0xf]
      %v181 = vld [vmem:[%s165 + $0x24] sm:$0xf]
      %v182 = vld [vmem:[%s165 + $0x28] sm:$0xf]
      %v183 = vld [vmem:[%s165 + $0x2c] sm:$0xf]
      %v184 = vld [vmem:[%s165 + $0x30] sm:$0xf]
      %v185 = vld [vmem:[%s165 + $0x34] sm:$0xf]
      %v186 = vld [vmem:[%s165 + $0x38] sm:$0xf]
      %v187 = vld [vmem:[%s165 + $0x3c] sm:$0xf]
      %v188 = vld [vmem:[%s165 + $0x40] sm:$0xf]
      %v189 = vld [vmem:[%s165 + $0x44] sm:$0xf]
      %v190 = vld [vmem:[%s165 + $0x48] sm:$0xf]
      %v191 = vld [vmem:[%s165 + $0x4c] sm:$0xf]
      %v192 = vld [vmem:[%s165 + $0x50] sm:$0xf]
      %v193 = vld [vmem:[%s165 + $0x54] sm:$0xf]
      %v194 = vld [vmem:[%s165 + $0x58] sm:$0xf]
      %v195 = vld [vmem:[%s165 + $0x5c] sm:$0xf]
      %v196 = vld [vmem:[%s165 + $0x60] sm:$0xf]
      %v197 = vld [vmem:[%s165 + $0x64] sm:$0xf]
      %v198 = vld [vmem:[%s165 + $0x68] sm:$0xf]
      %v199 = vld [vmem:[%s165 + $0x6c] sm:$0xf]
      %v200 = vld [vmem:[%s1] sm:$0x3]
      %v201 = vld [vmem:[%s165 + $0x70] sm:$0x1]
      %s202 = scalar_lea.vmem %s1, 2
      %v203 = vld [vmem:[%s202] sm:$0x3]
      %v233 = vunpack.c.l.b16 %v172
      %v234 = vunpack.c.l.b16 %v173
      %v235 = vunpack.c.l.b16 %v174
      %v236 = vunpack.c.l.b16 %v175
      %v237 = vunpack.c.l.b16 %v176
      %v238 = vunpack.c.l.b16 %v177
      %v239 = vunpack.c.l.b16 %v178
      %v240 = vunpack.c.l.b16 %v179
      %v241 = vunpack.c.l.b16 %v180
      %v242 = vunpack.c.l.b16 %v181
      %v243 = vunpack.c.l.b16 %v182
      %v244 = vunpack.c.l.b16 %v183
      %v245 = vunpack.c.l.b16 %v184
      %v246 = vunpack.c.l.b16 %v185
      %v247 = vunpack.c.l.b16 %v186
      %v248 = vunpack.c.l.b16 %v187
      %v249 = vunpack.c.l.b16 %v188
      %v250 = vunpack.c.l.b16 %v189
      %v251 = vunpack.c.l.b16 %v190
      %v252 = vunpack.c.l.b16 %v191
      %v253 = vunpack.c.l.b16 %v192
      %v254 = vunpack.c.l.b16 %v193
      %v255 = vunpack.c.l.b16 %v194
      %v256 = vunpack.c.l.b16 %v195
      %v257 = vunpack.c.l.b16 %v196
      %v258 = vunpack.c.l.b16 %v197
      %v259 = vunpack.c.l.b16 %v198
      %v260 = vunpack.c.l.b16 %v199
      %v261 = vunpack.c.l.b16 %v201
      %v262 = vpack.c.b16 %v234, %v233
      %v263 = vpack.c.b16 %v236, %v235
      %v264 = vpack.c.b16 %v238, %v237
      %v265 = vpack.c.b16 %v240, %v239
      %v266 = vpack.c.b16 %v242, %v241
      %v267 = vpack.c.b16 %v244, %v243
      %v268 = vpack.c.b16 %v246, %v245
      %v269 = vpack.c.b16 %v248, %v247
      %v270 = vpack.c.b16 %v250, %v249
      %v271 = vpack.c.b16 %v252, %v251
      %v272 = vpack.c.b16 %v254, %v253
      %v273 = vpack.c.b16 %v256, %v255
      %v274 = vpack.c.b16 %v258, %v257
      %v275 = vpack.c.b16 %v260, %v259
      %v276 = vpack.c.b16 %v261, %v261
      %vm277 = vsmask.f32 7424
      %v279 = vshrl.u32 %v262, 16
      %v281 = vshll.u32 %v262, 16
      %v283 = vrot.slane %v281, 1
      %v284 = vor.u32 %v279, %v283
      %v286 = vshll.u32 %v263, 16
      %v288 = vrot.slane %v286, 1
      %v289 = vsel %vm277, %v284, %v288
      %v290 = vshrl.u32 %v263, 16
      %v292 = vor.u32 %v290, %v288
      %v294 = vshll.u32 %v264, 16
      %v296 = vrot.slane %v294, 1
      %v297 = vsel %vm277, %v292, %v296
      %v298 = vshrl.u32 %v264, 16
      %v300 = vor.u32 %v298, %v296
      %v302 = vshll.u32 %v265, 16
      %v304 = vrot.slane %v302, 1
      %v305 = vsel %vm277, %v300, %v304
      %v306 = vshrl.u32 %v265, 16
      %v308 = vor.u32 %v306, %v304
      %v310 = vshll.u32 %v266, 16
      %v312 = vrot.slane %v310, 1
      %v313 = vsel %vm277, %v308, %v312
      %v314 = vshrl.u32 %v266, 16
      %v316 = vor.u32 %v314, %v312
      %v318 = vshll.u32 %v267, 16
      %v320 = vrot.slane %v318, 1
      %v321 = vsel %vm277, %v316, %v320
      %v322 = vshrl.u32 %v267, 16
      %v324 = vor.u32 %v322, %v320
      %v326 = vshll.u32 %v268, 16
      %v328 = vrot.slane %v326, 1
      %v329 = vsel %vm277, %v324, %v328
      %v330 = vshrl.u32 %v268, 16
      %v332 = vor.u32 %v330, %v328
      %v334 = vshll.u32 %v269, 16
      %v336 = vrot.slane %v334, 1
      %v337 = vsel %vm277, %v332, %v336
      %v338 = vshrl.u32 %v269, 16
      %v340 = vor.u32 %v338, %v336
      %v342 = vshll.u32 %v270, 16
      %v344 = vrot.slane %v342, 1
      %v345 = vsel %vm277, %v340, %v344
      %v346 = vshrl.u32 %v270, 16
      %v348 = vor.u32 %v346, %v344
      %v350 = vshll.u32 %v271, 16
      %v352 = vrot.slane %v350, 1
      %v353 = vsel %vm277, %v348, %v352
      %v354 = vshrl.u32 %v271, 16
      %v356 = vor.u32 %v354, %v352
      %v358 = vshll.u32 %v272, 16
      %v360 = vrot.slane %v358, 1
      %v361 = vsel %vm277, %v356, %v360
      %v362 = vshrl.u32 %v272, 16
      %v364 = vor.u32 %v362, %v360
      %v366 = vshll.u32 %v273, 16
      %v368 = vrot.slane %v366, 1
      %v369 = vsel %vm277, %v364, %v368
      %v370 = vshrl.u32 %v273, 16
      %v372 = vor.u32 %v370, %v368
      %v374 = vshll.u32 %v274, 16
      %v376 = vrot.slane %v374, 1
      %v377 = vsel %vm277, %v372, %v376
      %v378 = vshrl.u32 %v274, 16
      %v380 = vor.u32 %v378, %v376
      %v382 = vshll.u32 %v275, 16
      %v384 = vrot.slane %v382, 1
      %v385 = vsel %vm277, %v380, %v384
      %v386 = vshrl.u32 %v275, 16
      %v388 = vor.u32 %v386, %v384
      %v390 = vshll.u32 %v276, 16
      %v392 = vrot.slane %v390, 1
      %v393 = vsel %vm277, %v388, %v392
      %vm394 = vcmask 31744
      %v396 = vsel %vm394, %v289, 0
      %v399 = vsel %vm394, %v297, 0
      %v402 = vsel %vm394, %v305, 0
      %v405 = vsel %vm394, %v313, 0
      %v408 = vsel %vm394, %v321, 0
      %v411 = vsel %vm394, %v329, 0
      %v414 = vsel %vm394, %v337, 0
      %v417 = vsel %vm394, %v345, 0
      %v420 = vsel %vm394, %v353, 0
      %v423 = vsel %vm394, %v361, 0
      %v426 = vsel %vm394, %v369, 0
      %v429 = vsel %vm394, %v377, 0
      %v432 = vsel %vm394, %v385, 0
      %v435 = vsel %vm394, %v393, 0
      %vm437 = vcmask 1041408
      %v439 = vsel %vm437, %v203, 0
      %441 = vmatprep.subr.bf16.mxu0 0
      %442 = vmatpush1.bf16.msra.mxu0 0
      %443 = vmatprep.subr.bf16.mxu0 0
      %444 = vmatpush1.bf16.msra.mxu0 0
      %445 = vmatprep.subr.bf16.mxu0 0
      %446 = vmatpush1.bf16.msra.mxu0 0
      %447 = vmatprep.subr.bf16.mxu0 0
      %448 = vmatpush1.bf16.msra.mxu0 0
      %449 = vmatprep.subr.bf16.mxu0 0
      %450 = vmatpush1.bf16.msra.mxu0 0
      %451 = vmatprep.subr.bf16.mxu0 0
      %452 = vmatpush1.bf16.msra.mxu0 0
      %453 = vmatprep.subr.bf16.mxu0 0
      %454 = vmatpush1.bf16.msra.mxu0 0
      %455 = vmatprep.subr.bf16.mxu0 0
      %456 = vmatpush1.bf16.msra.mxu0 %v439
      %457 = vmatprep.subr.bf16.mxu0 0
      %458 = vmatpush2.bf16.msra.mxu0 0
      %459 = vmatprep.subr.bf16.mxu0 0
      %460 = vmatpush2.bf16.msra.mxu0 0
      %461 = vmatprep.subr.bf16.mxu0 0
      %462 = vmatpush2.bf16.msra.mxu0 0
      %463 = vmatprep.subr.bf16.mxu0 0
      %464 = vmatpush2.bf16.msra.mxu0 0
      %465 = vmatprep.subr.bf16.mxu0 0
      %466 = vmatpush2.bf16.msra.mxu0 0
      %467 = vmatprep.subr.bf16.mxu0 0
      %468 = vmatpush2.bf16.msra.mxu0 0
      %469 = vmatprep.subr.bf16.mxu0 0
      %470 = vmatpush2.bf16.msra.mxu0 0
      %471 = vmatprep.subr.bf16.mxu0 0
      %472 = vmatpush2.bf16.msra.mxu0 0
      %473 = vmatprep.mubr.bf16.mxu0 0
      %474 = vmatmul.mubr.bf16.gmra.mxu0 %v396
      %v475 = vpop.f32.mrf.mxu0
      %v476 = vadd.f32 0.0, %v475
      %v477 = vpop.f32.mrf.mxu0
      %v478 = vpop.f32.mrf.mxu0
      %v479 = vadd.f32 0.0, %v478
      %v480 = vpop.f32.mrf.mxu0
      %481 = vmatprep.mubr.bf16.mxu0 0
      %482 = vmatmul.mubr.bf16.gmra.mxu0 %v399
      %v483 = vpop.f32.mrf.mxu0
      %v484 = vadd.f32 0.0, %v483
      %v485 = vpop.f32.mrf.mxu0
      %v486 = vpop.f32.mrf.mxu0
      %v487 = vadd.f32 0.0, %v486
      %v488 = vpop.f32.mrf.mxu0
      %489 = vmatprep.mubr.bf16.mxu0 0
      %490 = vmatmul.mubr.bf16.gmra.mxu0 %v402
      %v491 = vpop.f32.mrf.mxu0
      %v492 = vadd.f32 0.0, %v491
      %v493 = vpop.f32.mrf.mxu0
      %v494 = vpop.f32.mrf.mxu0
      %v495 = vadd.f32 0.0, %v494
      %v496 = vpop.f32.mrf.mxu0
      %497 = vmatprep.mubr.bf16.mxu0 0
      %498 = vmatmul.mubr.bf16.gmra.mxu0 %v405
      %v499 = vpop.f32.mrf.mxu0
      %v500 = vadd.f32 0.0, %v499
      %v501 = vpop.f32.mrf.mxu0
      %v502 = vpop.f32.mrf.mxu0
      %v503 = vadd.f32 0.0, %v502
      %v504 = vpop.f32.mrf.mxu0
      %505 = vmatprep.mubr.bf16.mxu0 0
      %506 = vmatmul.mubr.bf16.gmra.mxu0 %v408
      %v507 = vpop.f32.mrf.mxu0
      %v508 = vadd.f32 0.0, %v507
      %v509 = vpop.f32.mrf.mxu0
      %v510 = vpop.f32.mrf.mxu0
      %v511 = vadd.f32 0.0, %v510
      %v512 = vpop.f32.mrf.mxu0
      %513 = vmatprep.mubr.bf16.mxu0 0
      %514 = vmatmul.mubr.bf16.gmra.mxu0 %v411
      %v515 = vpop.f32.mrf.mxu0
      %v516 = vadd.f32 0.0, %v515
      %v517 = vpop.f32.mrf.mxu0
      %v518 = vpop.f32.mrf.mxu0
      %v519 = vadd.f32 0.0, %v518
      %v520 = vpop.f32.mrf.mxu0
      %521 = vmatprep.mubr.bf16.mxu0 0
      %522 = vmatmul.mubr.bf16.gmra.mxu0 %v414
      %v523 = vpop.f32.mrf.mxu0
      %v524 = vadd.f32 0.0, %v523
      %v525 = vpop.f32.mrf.mxu0
      %v526 = vpop.f32.mrf.mxu0
      %v527 = vadd.f32 0.0, %v526
      %v528 = vpop.f32.mrf.mxu0
      %529 = vmatprep.mubr.bf16.mxu0 0
      %530 = vmatmul.mubr.bf16.gmra.mxu0 %v417
      %v531 = vpop.f32.mrf.mxu0
      %v532 = vadd.f32 0.0, %v531
      %v533 = vpop.f32.mrf.mxu0
      %v534 = vpop.f32.mrf.mxu0
      %v535 = vadd.f32 0.0, %v534
      %v536 = vpop.f32.mrf.mxu0
      %537 = vmatprep.mubr.bf16.mxu0 0
      %538 = vmatmul.mubr.bf16.gmra.mxu0 %v420
      %v539 = vpop.f32.mrf.mxu0
      %v540 = vadd.f32 0.0, %v539
      %v541 = vpop.f32.mrf.mxu0
      %v542 = vpop.f32.mrf.mxu0
      %v543 = vadd.f32 0.0, %v542
      %v544 = vpop.f32.mrf.mxu0
      %545 = vmatprep.mubr.bf16.mxu0 0
      %546 = vmatmul.mubr.bf16.gmra.mxu0 %v423
      %v547 = vpop.f32.mrf.mxu0
      %v548 = vadd.f32 0.0, %v547
      %v549 = vpop.f32.mrf.mxu0
      %v550 = vpop.f32.mrf.mxu0
      %v551 = vadd.f32 0.0, %v550
      %v552 = vpop.f32.mrf.mxu0
      %553 = vmatprep.mubr.bf16.mxu0 0
      %554 = vmatmul.mubr.bf16.gmra.mxu0 %v426
      %v555 = vpop.f32.mrf.mxu0
      %v556 = vadd.f32 0.0, %v555
      %v557 = vpop.f32.mrf.mxu0
      %v558 = vpop.f32.mrf.mxu0
      %v559 = vadd.f32 0.0, %v558
      %v560 = vpop.f32.mrf.mxu0
      %561 = vmatprep.mubr.bf16.mxu0 0
      %562 = vmatmul.mubr.bf16.gmra.mxu0 %v429
      %v563 = vpop.f32.mrf.mxu0
      %v564 = vadd.f32 0.0, %v563
      %v565 = vpop.f32.mrf.mxu0
      %v566 = vpop.f32.mrf.mxu0
      %v567 = vadd.f32 0.0, %v566
      %v568 = vpop.f32.mrf.mxu0
      %569 = vmatprep.mubr.bf16.mxu0 0
      %570 = vmatmul.mubr.bf16.gmra.mxu0 %v432
      %v571 = vpop.f32.mrf.mxu0
      %v572 = vadd.f32 0.0, %v571
      %v573 = vpop.f32.mrf.mxu0
      %v574 = vpop.f32.mrf.mxu0
      %v575 = vadd.f32 0.0, %v574
      %v576 = vpop.f32.mrf.mxu0
      %577 = vmatprep.mubr.bf16.mxu0 0
      %578 = vmatmul.mubr.bf16.gmra.mxu0 %v435
      %v579 = vpop.f32.mrf.mxu0
      %v580 = vadd.f32 0.0, %v579
      %v581 = vpop.f32.mrf.mxu0
      %v582 = vpop.f32.mrf.mxu0
      %v583 = vadd.f32 0.0, %v582
      %v584 = vpop.f32.mrf.mxu0
      %585 = vdwg.mxu0
      %v586 = vsel %vm394, %v262, 0
      %v588 = vsel %vm394, %v263, 0
      %v590 = vsel %vm394, %v264, 0
      %v592 = vsel %vm394, %v265, 0
      %v594 = vsel %vm394, %v266, 0
      %v596 = vsel %vm394, %v267, 0
      %v598 = vsel %vm394, %v268, 0
      %v600 = vsel %vm394, %v269, 0
      %v602 = vsel %vm394, %v270, 0
      %v604 = vsel %vm394, %v271, 0
      %v606 = vsel %vm394, %v272, 0
      %v608 = vsel %vm394, %v273, 0
      %v610 = vsel %vm394, %v274, 0
      %v612 = vsel %vm394, %v275, 0
      %v615 = vsel %vm437, %v200, 0
      %617 = vmatprep.subr.bf16.mxu0 0
      %618 = vmatpush1.bf16.msra.mxu0 0
      %619 = vmatprep.subr.bf16.mxu0 0
      %620 = vmatpush1.bf16.msra.mxu0 0
      %621 = vmatprep.subr.bf16.mxu0 0
      %622 = vmatpush1.bf16.msra.mxu0 0
      %623 = vmatprep.subr.bf16.mxu0 0
      %624 = vmatpush1.bf16.msra.mxu0 0
      %625 = vmatprep.subr.bf16.mxu0 0
      %626 = vmatpush1.bf16.msra.mxu0 0
      %627 = vmatprep.subr.bf16.mxu0 0
      %628 = vmatpush1.bf16.msra.mxu0 0
      %629 = vmatprep.subr.bf16.mxu0 0
      %630 = vmatpush1.bf16.msra.mxu0 0
      %631 = vmatprep.subr.bf16.mxu0 0
      %632 = vmatpush1.bf16.msra.mxu0 %v615
      %633 = vmatprep.subr.bf16.mxu0 0
      %634 = vmatpush2.bf16.msra.mxu0 0
      %635 = vmatprep.subr.bf16.mxu0 0
      %636 = vmatpush2.bf16.msra.mxu0 0
      %637 = vmatprep.subr.bf16.mxu0 0
      %638 = vmatpush2.bf16.msra.mxu0 0
      %639 = vmatprep.subr.bf16.mxu0 0
      %640 = vmatpush2.bf16.msra.mxu0 0
      %641 = vmatprep.subr.bf16.mxu0 0
      %642 = vmatpush2.bf16.msra.mxu0 0
      %643 = vmatprep.subr.bf16.mxu0 0
      %644 = vmatpush2.bf16.msra.mxu0 0
      %645 = vmatprep.subr.bf16.mxu0 0
      %646 = vmatpush2.bf16.msra.mxu0 0
      %647 = vmatprep.subr.bf16.mxu0 0
      %648 = vmatpush2.bf16.msra.mxu0 0
      %649 = vmatprep.mubr.bf16.mxu0 0
      %650 = vmatmul.mubr.bf16.gmra.mxu0 %v586
      %v651 = vpop.f32.mrf.mxu0
      %v652 = vadd.f32 %v476, %v651
      %v653 = vpop.f32.mrf.mxu0
      %v654 = vpop.f32.mrf.mxu0
      %v655 = vadd.f32 %v479, %v654
      %v656 = vpop.f32.mrf.mxu0
      %657 = vmatprep.mubr.bf16.mxu0 0
      %658 = vmatmul.mubr.bf16.gmra.mxu0 %v588
      %v659 = vpop.f32.mrf.mxu0
      %v660 = vadd.f32 %v484, %v659
      %v661 = vpop.f32.mrf.mxu0
      %v662 = vpop.f32.mrf.mxu0
      %v663 = vadd.f32 %v487, %v662
      %v664 = vpop.f32.mrf.mxu0
      %665 = vmatprep.mubr.bf16.mxu0 0
      %666 = vmatmul.mubr.bf16.gmra.mxu0 %v590
      %v667 = vpop.f32.mrf.mxu0
      %v668 = vadd.f32 %v492, %v667
      %v669 = vpop.f32.mrf.mxu0
      %v670 = vpop.f32.mrf.mxu0
      %v671 = vadd.f32 %v495, %v670
      %v672 = vpop.f32.mrf.mxu0
      %673 = vmatprep.mubr.bf16.mxu0 0
      %674 = vmatmul.mubr.bf16.gmra.mxu0 %v592
      %v675 = vpop.f32.mrf.mxu0
      %v676 = vadd.f32 %v500, %v675
      %v677 = vpop.f32.mrf.mxu0
      %v678 = vpop.f32.mrf.mxu0
      %v679 = vadd.f32 %v503, %v678
      %v680 = vpop.f32.mrf.mxu0
      %681 = vmatprep.mubr.bf16.mxu0 0
      %682 = vmatmul.mubr.bf16.gmra.mxu0 %v594
      %v683 = vpop.f32.mrf.mxu0
      %v684 = vadd.f32 %v508, %v683
      %v685 = vpop.f32.mrf.mxu0
      %v686 = vpop.f32.mrf.mxu0
      %v687 = vadd.f32 %v511, %v686
      %v688 = vpop.f32.mrf.mxu0
      %689 = vmatprep.mubr.bf16.mxu0 0
      %690 = vmatmul.mubr.bf16.gmra.mxu0 %v596
      %v691 = vpop.f32.mrf.mxu0
      %v692 = vadd.f32 %v516, %v691
      %v693 = vpop.f32.mrf.mxu0
      %v694 = vpop.f32.mrf.mxu0
      %v695 = vadd.f32 %v519, %v694
      %v696 = vpop.f32.mrf.mxu0
      %697 = vmatprep.mubr.bf16.mxu0 0
      %698 = vmatmul.mubr.bf16.gmra.mxu0 %v598
      %v699 = vpop.f32.mrf.mxu0
      %v700 = vadd.f32 %v524, %v699
      %v701 = vpop.f32.mrf.mxu0
      %v702 = vpop.f32.mrf.mxu0
      %v703 = vadd.f32 %v527, %v702
      %v704 = vpop.f32.mrf.mxu0
      %705 = vmatprep.mubr.bf16.mxu0 0
      %706 = vmatmul.mubr.bf16.gmra.mxu0 %v600
      %v707 = vpop.f32.mrf.mxu0
      %v708 = vadd.f32 %v532, %v707
      %v709 = vpop.f32.mrf.mxu0
      %v710 = vpop.f32.mrf.mxu0
      %v711 = vadd.f32 %v535, %v710
      %v712 = vpop.f32.mrf.mxu0
      %713 = vmatprep.mubr.bf16.mxu0 0
      %714 = vmatmul.mubr.bf16.gmra.mxu0 %v602
      %v715 = vpop.f32.mrf.mxu0
      %v716 = vadd.f32 %v540, %v715
      %v717 = vpop.f32.mrf.mxu0
      %v718 = vpop.f32.mrf.mxu0
      %v719 = vadd.f32 %v543, %v718
      %v720 = vpop.f32.mrf.mxu0
      %721 = vmatprep.mubr.bf16.mxu0 0
      %722 = vmatmul.mubr.bf16.gmra.mxu0 %v604
      %v723 = vpop.f32.mrf.mxu0
      %v724 = vadd.f32 %v548, %v723
      %v725 = vpop.f32.mrf.mxu0
      %v726 = vpop.f32.mrf.mxu0
      %v727 = vadd.f32 %v551, %v726
      %v728 = vpop.f32.mrf.mxu0
      %729 = vmatprep.mubr.bf16.mxu0 0
      %730 = vmatmul.mubr.bf16.gmra.mxu0 %v606
      %v731 = vpop.f32.mrf.mxu0
      %v732 = vadd.f32 %v556, %v731
      %v733 = vpop.f32.mrf.mxu0
      %v734 = vpop.f32.mrf.mxu0
      %v735 = vadd.f32 %v559, %v734
      %v736 = vpop.f32.mrf.mxu0
      %737 = vmatprep.mubr.bf16.mxu0 0
      %738 = vmatmul.mubr.bf16.gmra.mxu0 %v608
      %v739 = vpop.f32.mrf.mxu0
      %v740 = vadd.f32 %v564, %v739
      %v741 = vpop.f32.mrf.mxu0
      %v742 = vpop.f32.mrf.mxu0
      %v743 = vadd.f32 %v567, %v742
      %v744 = vpop.f32.mrf.mxu0
      %745 = vmatprep.mubr.bf16.mxu0 0
      %746 = vmatmul.mubr.bf16.gmra.mxu0 %v610
      %v747 = vpop.f32.mrf.mxu0
      %v748 = vadd.f32 %v572, %v747
      %v749 = vpop.f32.mrf.mxu0
      %v750 = vpop.f32.mrf.mxu0
      %v751 = vadd.f32 %v575, %v750
      %v752 = vpop.f32.mrf.mxu0
      %753 = vmatprep.mubr.bf16.mxu0 0
      %754 = vmatmul.mubr.bf16.gmra.mxu0 %v612
      %v755 = vpop.f32.mrf.mxu0
      %v756 = vadd.f32 %v580, %v755
      %v757 = vpop.f32.mrf.mxu0
      %v758 = vpop.f32.mrf.mxu0
      %v759 = vadd.f32 %v583, %v758
      %v760 = vpop.f32.mrf.mxu0
      %761 = vdwg.mxu0
      %v762 = vld [vmem:[%s165] sm:$0xe]
      %s763 = scalar_lea.vmem %s1, 4
      %v764 = vld [vmem:[%s763] sm:$0x3]
      %v766 = vunpack.c.l.b16 %v762
      %v767 = vpack.c.b16 %v234, %v766
      %vm768 = vcmask 1046528
      %v769 = vrot.slane %v767, 1
      %v770 = vrot.slane %v263, 1
      %v771 = vsel %vm768, %v769, %v770
      %v772 = vrot.slane %v264, 1
      %v773 = vsel %vm768, %v770, %v772
      %v774 = vrot.slane %v265, 1
      %v775 = vsel %vm768, %v772, %v774
      %v776 = vrot.slane %v266, 1
      %v777 = vsel %vm768, %v774, %v776
      %v778 = vrot.slane %v267, 1
      %v779 = vsel %vm768, %v776, %v778
      %v780 = vrot.slane %v268, 1
      %v781 = vsel %vm768, %v778, %v780
      %v782 = vrot.slane %v269, 1
      %v783 = vsel %vm768, %v780, %v782
      %v784 = vrot.slane %v270, 1
      %v785 = vsel %vm768, %v782, %v784
      %v786 = vrot.slane %v271, 1
      %v787 = vsel %vm768, %v784, %v786
      %v788 = vrot.slane %v272, 1
      %v789 = vsel %vm768, %v786, %v788
      %v790 = vrot.slane %v273, 1
      %v791 = vsel %vm768, %v788, %v790
      %v792 = vrot.slane %v274, 1
      %v793 = vsel %vm768, %v790, %v792
      %v794 = vrot.slane %v275, 1
      %v795 = vsel %vm768, %v792, %v794
      %v796 = vrot.slane %v276, 1
      %v797 = vsel %vm768, %v794, %v796
      %v799 = vsel %vm394, %v771, 0
      %v802 = vsel %vm394, %v773, 0
      %v805 = vsel %vm394, %v775, 0
      %v808 = vsel %vm394, %v777, 0
      %v811 = vsel %vm394, %v779, 0
      %v814 = vsel %vm394, %v781, 0
      %v817 = vsel %vm394, %v783, 0
      %v820 = vsel %vm394, %v785, 0
      %v823 = vsel %vm394, %v787, 0
      %v826 = vsel %vm394, %v789, 0
      %v829 = vsel %vm394, %v791, 0
      %v832 = vsel %vm394, %v793, 0
      %v835 = vsel %vm394, %v795, 0
      %v838 = vsel %vm394, %v797, 0
      %v841 = vsel %vm437, %v764, 0
      %843 = vmatprep.subr.bf16.mxu0 0
      %844 = vmatpush1.bf16.msra.mxu0 0
      %845 = vmatprep.subr.bf16.mxu0 0
      %846 = vmatpush1.bf16.msra.mxu0 0
      %847 = vmatprep.subr.bf16.mxu0 0
      %848 = vmatpush1.bf16.msra.mxu0 0
      %849 = vmatprep.subr.bf16.mxu0 0
      %850 = vmatpush1.bf16.msra.mxu0 0
      %851 = vmatprep.subr.bf16.mxu0 0
      %852 = vmatpush1.bf16.msra.mxu0 0
      %853 = vmatprep.subr.bf16.mxu0 0
      %854 = vmatpush1.bf16.msra.mxu0 0
      %855 = vmatprep.subr.bf16.mxu0 0
      %856 = vmatpush1.bf16.msra.mxu0 0
      %857 = vmatprep.subr.bf16.mxu0 0
      %858 = vmatpush1.bf16.msra.mxu0 %v841
      %859 = vmatprep.subr.bf16.mxu0 0
      %860 = vmatpush2.bf16.msra.mxu0 0
      %861 = vmatprep.subr.bf16.mxu0 0
      %862 = vmatpush2.bf16.msra.mxu0 0
      %863 = vmatprep.subr.bf16.mxu0 0
      %864 = vmatpush2.bf16.msra.mxu0 0
      %865 = vmatprep.subr.bf16.mxu0 0
      %866 = vmatpush2.bf16.msra.mxu0 0
      %867 = vmatprep.subr.bf16.mxu0 0
      %868 = vmatpush2.bf16.msra.mxu0 0
      %869 = vmatprep.subr.bf16.mxu0 0
      %870 = vmatpush2.bf16.msra.mxu0 0
      %871 = vmatprep.subr.bf16.mxu0 0
      %872 = vmatpush2.bf16.msra.mxu0 0
      %873 = vmatprep.subr.bf16.mxu0 0
      %874 = vmatpush2.bf16.msra.mxu0 0
      %875 = vmatprep.mubr.bf16.mxu0 0
      %876 = vmatmul.mubr.bf16.gmra.mxu0 %v799
      %v877 = vpop.f32.mrf.mxu0
      %v878 = vadd.f32 0.0, %v877
      %v879 = vpop.f32.mrf.mxu0
      %v880 = vpop.f32.mrf.mxu0
      %v881 = vadd.f32 0.0, %v880
      %v882 = vpop.f32.mrf.mxu0
      %883 = vmatprep.mubr.bf16.mxu0 0
      %884 = vmatmul.mubr.bf16.gmra.mxu0 %v802
      %v885 = vpop.f32.mrf.mxu0
      %v886 = vadd.f32 0.0, %v885
      %v887 = vpop.f32.mrf.mxu0
      %v888 = vpop.f32.mrf.mxu0
      %v889 = vadd.f32 0.0, %v888
      %v890 = vpop.f32.mrf.mxu0
      %891 = vmatprep.mubr.bf16.mxu0 0
      %892 = vmatmul.mubr.bf16.gmra.mxu0 %v805
      %v893 = vpop.f32.mrf.mxu0
      %v894 = vadd.f32 0.0, %v893
      %v895 = vpop.f32.mrf.mxu0
      %v896 = vpop.f32.mrf.mxu0
      %v897 = vadd.f32 0.0, %v896
      %v898 = vpop.f32.mrf.mxu0
      %899 = vmatprep.mubr.bf16.mxu0 0
      %900 = vmatmul.mubr.bf16.gmra.mxu0 %v808
      %v901 = vpop.f32.mrf.mxu0
      %v902 = vadd.f32 0.0, %v901
      %v903 = vpop.f32.mrf.mxu0
      %v904 = vpop.f32.mrf.mxu0
      %v905 = vadd.f32 0.0, %v904
      %v906 = vpop.f32.mrf.mxu0
      %907 = vmatprep.mubr.bf16.mxu0 0
      %908 = vmatmul.mubr.bf16.gmra.mxu0 %v811
      %v909 = vpop.f32.mrf.mxu0
      %v910 = vadd.f32 0.0, %v909
      %v911 = vpop.f32.mrf.mxu0
      %v912 = vpop.f32.mrf.mxu0
      %v913 = vadd.f32 0.0, %v912
      %v914 = vpop.f32.mrf.mxu0
      %915 = vmatprep.mubr.bf16.mxu0 0
      %916 = vmatmul.mubr.bf16.gmra.mxu0 %v814
      %v917 = vpop.f32.mrf.mxu0
      %v918 = vadd.f32 0.0, %v917
      %v919 = vpop.f32.mrf.mxu0
      %v920 = vpop.f32.mrf.mxu0
      %v921 = vadd.f32 0.0, %v920
      %v922 = vpop.f32.mrf.mxu0
      %923 = vmatprep.mubr.bf16.mxu0 0
      %924 = vmatmul.mubr.bf16.gmra.mxu0 %v817
      %v925 = vpop.f32.mrf.mxu0
      %v926 = vadd.f32 0.0, %v925
      %v927 = vpop.f32.mrf.mxu0
      %v928 = vpop.f32.mrf.mxu0
      %v929 = vadd.f32 0.0, %v928
      %v930 = vpop.f32.mrf.mxu0
      %931 = vmatprep.mubr.bf16.mxu0 0
      %932 = vmatmul.mubr.bf16.gmra.mxu0 %v820
      %v933 = vpop.f32.mrf.mxu0
      %v934 = vadd.f32 0.0, %v933
      %v935 = vpop.f32.mrf.mxu0
      %v936 = vpop.f32.mrf.mxu0
      %v937 = vadd.f32 0.0, %v936
      %v938 = vpop.f32.mrf.mxu0
      %939 = vmatprep.mubr.bf16.mxu0 0
      %940 = vmatmul.mubr.bf16.gmra.mxu0 %v823
      %v941 = vpop.f32.mrf.mxu0
      %v942 = vadd.f32 0.0, %v941
      %v943 = vpop.f32.mrf.mxu0
      %v944 = vpop.f32.mrf.mxu0
      %v945 = vadd.f32 0.0, %v944
      %v946 = vpop.f32.mrf.mxu0
      %947 = vmatprep.mubr.bf16.mxu0 0
      %948 = vmatmul.mubr.bf16.gmra.mxu0 %v826
      %v949 = vpop.f32.mrf.mxu0
      %v950 = vadd.f32 0.0, %v949
      %v951 = vpop.f32.mrf.mxu0
      %v952 = vpop.f32.mrf.mxu0
      %v953 = vadd.f32 0.0, %v952
      %v954 = vpop.f32.mrf.mxu0
      %955 = vmatprep.mubr.bf16.mxu0 0
      %956 = vmatmul.mubr.bf16.gmra.mxu0 %v829
      %v957 = vpop.f32.mrf.mxu0
      %v958 = vadd.f32 0.0, %v957
      %v959 = vpop.f32.mrf.mxu0
      %v960 = vpop.f32.mrf.mxu0
      %v961 = vadd.f32 0.0, %v960
      %v962 = vpop.f32.mrf.mxu0
      %963 = vmatprep.mubr.bf16.mxu0 0
      %964 = vmatmul.mubr.bf16.gmra.mxu0 %v832
      %v965 = vpop.f32.mrf.mxu0
      %v966 = vadd.f32 0.0, %v965
      %v967 = vpop.f32.mrf.mxu0
      %v968 = vpop.f32.mrf.mxu0
      %v969 = vadd.f32 0.0, %v968
      %v970 = vpop.f32.mrf.mxu0
      %971 = vmatprep.mubr.bf16.mxu0 0
      %972 = vmatmul.mubr.bf16.gmra.mxu0 %v835
      %v973 = vpop.f32.mrf.mxu0
      %v974 = vadd.f32 0.0, %v973
      %v975 = vpop.f32.mrf.mxu0
      %v976 = vpop.f32.mrf.mxu0
      %v977 = vadd.f32 0.0, %v976
      %v978 = vpop.f32.mrf.mxu0
      %979 = vmatprep.mubr.bf16.mxu0 0
      %980 = vmatmul.mubr.bf16.gmra.mxu0 %v838
      %v981 = vpop.f32.mrf.mxu0
      %v982 = vadd.f32 0.0, %v981
      %v983 = vpop.f32.mrf.mxu0
      %v984 = vpop.f32.mrf.mxu0
      %v985 = vadd.f32 0.0, %v984
      %v986 = vpop.f32.mrf.mxu0
      %987 = vdwg.mxu0
      %v988 = vadd.f32 %v652, %v878
      %v989 = vadd.f32 %v655, %v881
      %v990 = vadd.f32 %v660, %v886
      %v991 = vadd.f32 %v663, %v889
      %v992 = vadd.f32 %v668, %v894
      %v993 = vadd.f32 %v671, %v897
      %v994 = vadd.f32 %v676, %v902
      %v995 = vadd.f32 %v679, %v905
      %v996 = vadd.f32 %v684, %v910
      %v997 = vadd.f32 %v687, %v913
      %v998 = vadd.f32 %v692, %v918
      %v999 = vadd.f32 %v695, %v921
      %v1000 = vadd.f32 %v700, %v926
      %v1001 = vadd.f32 %v703, %v929
      %v1002 = vadd.f32 %v708, %v934
      %v1003 = vadd.f32 %v711, %v937
      %v1004 = vadd.f32 %v716, %v942
      %v1005 = vadd.f32 %v719, %v945
      %v1006 = vadd.f32 %v724, %v950
      %v1007 = vadd.f32 %v727, %v953
      %v1008 = vadd.f32 %v732, %v958
      %v1009 = vadd.f32 %v735, %v961
      %v1010 = vadd.f32 %v740, %v966
      %v1011 = vadd.f32 %v743, %v969
      %v1012 = vadd.f32 %v748, %v974
      %v1013 = vadd.f32 %v751, %v977
      %v1014 = vadd.f32 %v756, %v982
      %v1015 = vadd.f32 %v759, %v985
      %v1016 = vld [vmem:[%s165 + $0x8] sm:$0xf]
      %v1017 = vld [vmem:[%s165 + $0xc] sm:$0xf]
      %v1018 = vld [vmem:[%s165 + $0x10] sm:$0xf]
      %v1019 = vld [vmem:[%s165 + $0x14] sm:$0xf]
      %v1020 = vld [vmem:[%s165 + $0x18] sm:$0xf]
      %v1021 = vld [vmem:[%s165 + $0x1c] sm:$0xf]
      %v1022 = vld [vmem:[%s165 + $0x20] sm:$0xf]
      %v1023 = vld [vmem:[%s165 + $0x24] sm:$0xf]
      %v1024 = vld [vmem:[%s165 + $0x28] sm:$0xf]
      %v1025 = vld [vmem:[%s165 + $0x2c] sm:$0xf]
      %v1026 = vld [vmem:[%s165 + $0x30] sm:$0xf]
      %v1027 = vld [vmem:[%s165 + $0x34] sm:$0xf]
      %v1028 = vld [vmem:[%s165 + $0x38] sm:$0xf]
      %v1029 = vld [vmem:[%s165 + $0x3c] sm:$0xf]
      %v1030 = vld [vmem:[%s165 + $0x40] sm:$0xf]
      %v1031 = vld [vmem:[%s165 + $0x44] sm:$0xf]
      %v1032 = vld [vmem:[%s165 + $0x48] sm:$0xf]
      %v1033 = vld [vmem:[%s165 + $0x4c] sm:$0xf]
      %v1034 = vld [vmem:[%s165 + $0x50] sm:$0xf]
      %v1035 = vld [vmem:[%s165 + $0x54] sm:$0xf]
      %v1036 = vld [vmem:[%s165 + $0x58] sm:$0xf]
      %v1037 = vld [vmem:[%s165 + $0x5c] sm:$0xf]
      %v1038 = vld [vmem:[%s165 + $0x60] sm:$0xf]
      %v1039 = vld [vmem:[%s165 + $0x64] sm:$0xf]
      %v1040 = vld [vmem:[%s165 + $0x68] sm:$0xf]
      %v1041 = vld [vmem:[%s165 + $0x6c] sm:$0xf]
      %v1042 = vld [vmem:[%s165 + $0x70] sm:$0xf]
      %v1043 = vld [vmem:[%s165 + $0x74] sm:$0xf]
      %s1044 = scalar_lea.vmem %s1, 6
      %v1045 = vld [vmem:[%s1044] sm:$0x3]
      %v1074 = vunpack.c.l.b16 %v1016
      %v1075 = vunpack.c.l.b16 %v1017
      %v1076 = vunpack.c.l.b16 %v1018
      %v1077 = vunpack.c.l.b16 %v1019
      %v1078 = vunpack.c.l.b16 %v1020
      %v1079 = vunpack.c.l.b16 %v1021
      %v1080 = vunpack.c.l.b16 %v1022
      %v1081 = vunpack.c.l.b16 %v1023
      %v1082 = vunpack.c.l.b16 %v1024
      %v1083 = vunpack.c.l.b16 %v1025
      %v1084 = vunpack.c.l.b16 %v1026
      %v1085 = vunpack.c.l.b16 %v1027
      %v1086 = vunpack.c.l.b16 %v1028
      %v1087 = vunpack.c.l.b16 %v1029
      %v1088 = vunpack.c.l.b16 %v1030
      %v1089 = vunpack.c.l.b16 %v1031
      %v1090 = vunpack.c.l.b16 %v1032
      %v1091 = vunpack.c.l.b16 %v1033
      %v1092 = vunpack.c.l.b16 %v1034
      %v1093 = vunpack.c.l.b16 %v1035
      %v1094 = vunpack.c.l.b16 %v1036
      %v1095 = vunpack.c.l.b16 %v1037
      %v1096 = vunpack.c.l.b16 %v1038
      %v1097 = vunpack.c.l.b16 %v1039
      %v1098 = vunpack.c.l.b16 %v1040
      %v1099 = vunpack.c.l.b16 %v1041
      %v1100 = vunpack.c.l.b16 %v1042
      %v1101 = vunpack.c.l.b16 %v1043
      %v1102 = vpack.c.b16 %v1075, %v1074
      %v1103 = vpack.c.b16 %v1077, %v1076
      %v1104 = vpack.c.b16 %v1079, %v1078
      %v1105 = vpack.c.b16 %v1081, %v1080
      %v1106 = vpack.c.b16 %v1083, %v1082
      %v1107 = vpack.c.b16 %v1085, %v1084
      %v1108 = vpack.c.b16 %v1087, %v1086
      %v1109 = vpack.c.b16 %v1089, %v1088
      %v1110 = vpack.c.b16 %v1091, %v1090
      %v1111 = vpack.c.b16 %v1093, %v1092
      %v1112 = vpack.c.b16 %v1095, %v1094
      %v1113 = vpack.c.b16 %v1097, %v1096
      %v1114 = vpack.c.b16 %v1099, %v1098
      %v1115 = vpack.c.b16 %v1101, %v1100
      %v1117 = vsel %vm394, %v1102, 0
      %v1120 = vsel %vm394, %v1103, 0
      %v1123 = vsel %vm394, %v1104, 0
      %v1126 = vsel %vm394, %v1105, 0
      %v1129 = vsel %vm394, %v1106, 0
      %v1132 = vsel %vm394, %v1107, 0
      %v1135 = vsel %vm394, %v1108, 0
      %v1138 = vsel %vm394, %v1109, 0
      %v1141 = vsel %vm394, %v1110, 0
      %v1144 = vsel %vm394, %v1111, 0
      %v1147 = vsel %vm394, %v1112, 0
      %v1150 = vsel %vm394, %v1113, 0
      %v1153 = vsel %vm394, %v1114, 0
      %v1156 = vsel %vm394, %v1115, 0
      %v1159 = vsel %vm437, %v1045, 0
      %1161 = vmatprep.subr.bf16.mxu0 0
      %1162 = vmatpush1.bf16.msra.mxu0 0
      %1163 = vmatprep.subr.bf16.mxu0 0
      %1164 = vmatpush1.bf16.msra.mxu0 0
      %1165 = vmatprep.subr.bf16.mxu0 0
      %1166 = vmatpush1.bf16.msra.mxu0 0
      %1167 = vmatprep.subr.bf16.mxu0 0
      %1168 = vmatpush1.bf16.msra.mxu0 0
      %1169 = vmatprep.subr.bf16.mxu0 0
      %1170 = vmatpush1.bf16.msra.mxu0 0
      %1171 = vmatprep.subr.bf16.mxu0 0
      %1172 = vmatpush1.bf16.msra.mxu0 0
      %1173 = vmatprep.subr.bf16.mxu0 0
      %1174 = vmatpush1.bf16.msra.mxu0 0
      %1175 = vmatprep.subr.bf16.mxu0 0
      %1176 = vmatpush1.bf16.msra.mxu0 %v1159
      %1177 = vmatprep.subr.bf16.mxu0 0
      %1178 = vmatpush2.bf16.msra.mxu0 0
      %1179 = vmatprep.subr.bf16.mxu0 0
      %1180 = vmatpush2.bf16.msra.mxu0 0
      %1181 = vmatprep.subr.bf16.mxu0 0
      %1182 = vmatpush2.bf16.msra.mxu0 0
      %1183 = vmatprep.subr.bf16.mxu0 0
      %1184 = vmatpush2.bf16.msra.mxu0 0
      %1185 = vmatprep.subr.bf16.mxu0 0
      %1186 = vmatpush2.bf16.msra.mxu0 0
      %1187 = vmatprep.subr.bf16.mxu0 0
      %1188 = vmatpush2.bf16.msra.mxu0 0
      %1189 = vmatprep.subr.bf16.mxu0 0
      %1190 = vmatpush2.bf16.msra.mxu0 0
      %1191 = vmatprep.subr.bf16.mxu0 0
      %1192 = vmatpush2.bf16.msra.mxu0 0
      %1193 = vmatprep.mubr.bf16.mxu0 0
      %1194 = vmatmul.mubr.bf16.gmra.mxu0 %v1117
      %v1195 = vpop.f32.mrf.mxu0
      %v1196 = vadd.f32 0.0, %v1195
      %v1197 = vpop.f32.mrf.mxu0
      %v1198 = vpop.f32.mrf.mxu0
      %v1199 = vadd.f32 0.0, %v1198
      %v1200 = vpop.f32.mrf.mxu0
      %1201 = vmatprep.mubr.bf16.mxu0 0
      %1202 = vmatmul.mubr.bf16.gmra.mxu0 %v1120
      %v1203 = vpop.f32.mrf.mxu0
      %v1204 = vadd.f32 0.0, %v1203
      %v1205 = vpop.f32.mrf.mxu0
      %v1206 = vpop.f32.mrf.mxu0
      %v1207 = vadd.f32 0.0, %v1206
      %v1208 = vpop.f32.mrf.mxu0
      %1209 = vmatprep.mubr.bf16.mxu0 0
      %1210 = vmatmul.mubr.bf16.gmra.mxu0 %v1123
      %v1211 = vpop.f32.mrf.mxu0
      %v1212 = vadd.f32 0.0, %v1211
      %v1213 = vpop.f32.mrf.mxu0
      %v1214 = vpop.f32.mrf.mxu0
      %v1215 = vadd.f32 0.0, %v1214
      %v1216 = vpop.f32.mrf.mxu0
      %1217 = vmatprep.mubr.bf16.mxu0 0
      %1218 = vmatmul.mubr.bf16.gmra.mxu0 %v1126
      %v1219 = vpop.f32.mrf.mxu0
      %v1220 = vadd.f32 0.0, %v1219
      %v1221 = vpop.f32.mrf.mxu0
      %v1222 = vpop.f32.mrf.mxu0
      %v1223 = vadd.f32 0.0, %v1222
      %v1224 = vpop.f32.mrf.mxu0
      %1225 = vmatprep.mubr.bf16.mxu0 0
      %1226 = vmatmul.mubr.bf16.gmra.mxu0 %v1129
      %v1227 = vpop.f32.mrf.mxu0
      %v1228 = vadd.f32 0.0, %v1227
      %v1229 = vpop.f32.mrf.mxu0
      %v1230 = vpop.f32.mrf.mxu0
      %v1231 = vadd.f32 0.0, %v1230
      %v1232 = vpop.f32.mrf.mxu0
      %1233 = vmatprep.mubr.bf16.mxu0 0
      %1234 = vmatmul.mubr.bf16.gmra.mxu0 %v1132
      %v1235 = vpop.f32.mrf.mxu0
      %v1236 = vadd.f32 0.0, %v1235
      %v1237 = vpop.f32.mrf.mxu0
      %v1238 = vpop.f32.mrf.mxu0
      %v1239 = vadd.f32 0.0, %v1238
      %v1240 = vpop.f32.mrf.mxu0
      %1241 = vmatprep.mubr.bf16.mxu0 0
      %1242 = vmatmul.mubr.bf16.gmra.mxu0 %v1135
      %v1243 = vpop.f32.mrf.mxu0
      %v1244 = vadd.f32 0.0, %v1243
      %v1245 = vpop.f32.mrf.mxu0
      %v1246 = vpop.f32.mrf.mxu0
      %v1247 = vadd.f32 0.0, %v1246
      %v1248 = vpop.f32.mrf.mxu0
      %1249 = vmatprep.mubr.bf16.mxu0 0
      %1250 = vmatmul.mubr.bf16.gmra.mxu0 %v1138
      %v1251 = vpop.f32.mrf.mxu0
      %v1252 = vadd.f32 0.0, %v1251
      %v1253 = vpop.f32.mrf.mxu0
      %v1254 = vpop.f32.mrf.mxu0
      %v1255 = vadd.f32 0.0, %v1254
      %v1256 = vpop.f32.mrf.mxu0
      %1257 = vmatprep.mubr.bf16.mxu0 0
      %1258 = vmatmul.mubr.bf16.gmra.mxu0 %v1141
      %v1259 = vpop.f32.mrf.mxu0
      %v1260 = vadd.f32 0.0, %v1259
      %v1261 = vpop.f32.mrf.mxu0
      %v1262 = vpop.f32.mrf.mxu0
      %v1263 = vadd.f32 0.0, %v1262
      %v1264 = vpop.f32.mrf.mxu0
      %1265 = vmatprep.mubr.bf16.mxu0 0
      %1266 = vmatmul.mubr.bf16.gmra.mxu0 %v1144
      %v1267 = vpop.f32.mrf.mxu0
      %v1268 = vadd.f32 0.0, %v1267
      %v1269 = vpop.f32.mrf.mxu0
      %v1270 = vpop.f32.mrf.mxu0
      %v1271 = vadd.f32 0.0, %v1270
      %v1272 = vpop.f32.mrf.mxu0
      %1273 = vmatprep.mubr.bf16.mxu0 0
      %1274 = vmatmul.mubr.bf16.gmra.mxu0 %v1147
      %v1275 = vpop.f32.mrf.mxu0
      %v1276 = vadd.f32 0.0, %v1275
      %v1277 = vpop.f32.mrf.mxu0
      %v1278 = vpop.f32.mrf.mxu0
      %v1279 = vadd.f32 0.0, %v1278
      %v1280 = vpop.f32.mrf.mxu0
      %1281 = vmatprep.mubr.bf16.mxu0 0
      %1282 = vmatmul.mubr.bf16.gmra.mxu0 %v1150
      %v1283 = vpop.f32.mrf.mxu0
      %v1284 = vadd.f32 0.0, %v1283
      %v1285 = vpop.f32.mrf.mxu0
      %v1286 = vpop.f32.mrf.mxu0
      %v1287 = vadd.f32 0.0, %v1286
      %v1288 = vpop.f32.mrf.mxu0
      %1289 = vmatprep.mubr.bf16.mxu0 0
      %1290 = vmatmul.mubr.bf16.gmra.mxu0 %v1153
      %v1291 = vpop.f32.mrf.mxu0
      %v1292 = vadd.f32 0.0, %v1291
      %v1293 = vpop.f32.mrf.mxu0
      %v1294 = vpop.f32.mrf.mxu0
      %v1295 = vadd.f32 0.0, %v1294
      %v1296 = vpop.f32.mrf.mxu0
      %1297 = vmatprep.mubr.bf16.mxu0 0
      %1298 = vmatmul.mubr.bf16.gmra.mxu0 %v1156
      %v1299 = vpop.f32.mrf.mxu0
      %v1300 = vadd.f32 0.0, %v1299
      %v1301 = vpop.f32.mrf.mxu0
      %v1302 = vpop.f32.mrf.mxu0
      %v1303 = vadd.f32 0.0, %v1302
      %v1304 = vpop.f32.mrf.mxu0
      %1305 = vdwg.mxu0
      %v1306 = vadd.f32 %v988, %v1196
      %v1307 = vadd.f32 %v989, %v1199
      %v1308 = vadd.f32 %v990, %v1204
      %v1309 = vadd.f32 %v991, %v1207
      %v1310 = vadd.f32 %v992, %v1212
      %v1311 = vadd.f32 %v993, %v1215
      %v1312 = vadd.f32 %v994, %v1220
      %v1313 = vadd.f32 %v995, %v1223
      %v1314 = vadd.f32 %v996, %v1228
      %v1315 = vadd.f32 %v997, %v1231
      %v1316 = vadd.f32 %v998, %v1236
      %v1317 = vadd.f32 %v999, %v1239
      %v1318 = vadd.f32 %v1000, %v1244
      %v1319 = vadd.f32 %v1001, %v1247
      %v1320 = vadd.f32 %v1002, %v1252
      %v1321 = vadd.f32 %v1003, %v1255
      %v1322 = vadd.f32 %v1004, %v1260
      %v1323 = vadd.f32 %v1005, %v1263
      %v1324 = vadd.f32 %v1006, %v1268
      %v1325 = vadd.f32 %v1007, %v1271
      %v1326 = vadd.f32 %v1008, %v1276
      %v1327 = vadd.f32 %v1009, %v1279
      %v1328 = vadd.f32 %v1010, %v1284
      %v1329 = vadd.f32 %v1011, %v1287
      %v1330 = vadd.f32 %v1012, %v1292
      %v1331 = vadd.f32 %v1013, %v1295
      %v1332 = vadd.f32 %v1014, %v1300
      %v1333 = vadd.f32 %v1015, %v1303
      %v1334 = vld [vmem:[%s165 + $0x8] sm:$0xf]
      %v1335 = vld [vmem:[%s165 + $0xc] sm:$0xf]
      %v1336 = vld [vmem:[%s165 + $0x10] sm:$0xf]
      %v1337 = vld [vmem:[%s165 + $0x14] sm:$0xf]
      %v1338 = vld [vmem:[%s165 + $0x18] sm:$0xf]
      %v1339 = vld [vmem:[%s165 + $0x1c] sm:$0xf]
      %v1340 = vld [vmem:[%s165 + $0x20] sm:$0xf]
      %v1341 = vld [vmem:[%s165 + $0x24] sm:$0xf]
      %v1342 = vld [vmem:[%s165 + $0x28] sm:$0xf]
      %v1343 = vld [vmem:[%s165 + $0x2c] sm:$0xf]
      %v1344 = vld [vmem:[%s165 + $0x30] sm:$0xf]
      %v1345 = vld [vmem:[%s165 + $0x34] sm:$0xf]
      %v1346 = vld [vmem:[%s165 + $0x38] sm:$0xf]
      %v1347 = vld [vmem:[%s165 + $0x3c] sm:$0xf]
      %v1348 = vld [vmem:[%s165 + $0x40] sm:$0xf]
      %v1349 = vld [vmem:[%s165 + $0x44] sm:$0xf]
      %v1350 = vld [vmem:[%s165 + $0x48] sm:$0xf]
      %v1351 = vld [vmem:[%s165 + $0x4c] sm:$0xf]
      %v1352 = vld [vmem:[%s165 + $0x50] sm:$0xf]
      %v1353 = vld [vmem:[%s165 + $0x54] sm:$0xf]
      %v1354 = vld [vmem:[%s165 + $0x58] sm:$0xf]
      %v1355 = vld [vmem:[%s165 + $0x5c] sm:$0xf]
      %v1356 = vld [vmem:[%s165 + $0x60] sm:$0xf]
      %v1357 = vld [vmem:[%s165 + $0x64] sm:$0xf]
      %v1358 = vld [vmem:[%s165 + $0x68] sm:$0xf]
      %v1359 = vld [vmem:[%s165 + $0x6c] sm:$0xf]
      %v1360 = vld [vmem:[%s165 + $0x70] sm:$0xf]
      %v1361 = vld [vmem:[%s165 + $0x74] sm:$0xf]
      %v1362 = vld [vmem:[%s165 + $0x78] sm:$0x1]
      %s1363 = scalar_lea.vmem %s1, 8
      %v1364 = vld [vmem:[%s1363] sm:$0x3]
      %v1394 = vunpack.c.l.b16 %v1334
      %v1395 = vunpack.c.l.b16 %v1335
      %v1396 = vunpack.c.l.b16 %v1336
      %v1397 = vunpack.c.l.b16 %v1337
      %v1398 = vunpack.c.l.b16 %v1338
      %v1399 = vunpack.c.l.b16 %v1339
      %v1400 = vunpack.c.l.b16 %v1340
      %v1401 = vunpack.c.l.b16 %v1341
      %v1402 = vunpack.c.l.b16 %v1342
      %v1403 = vunpack.c.l.b16 %v1343
      %v1404 = vunpack.c.l.b16 %v1344
      %v1405 = vunpack.c.l.b16 %v1345
      %v1406 = vunpack.c.l.b16 %v1346
      %v1407 = vunpack.c.l.b16 %v1347
      %v1408 = vunpack.c.l.b16 %v1348
      %v1409 = vunpack.c.l.b16 %v1349
      %v1410 = vunpack.c.l.b16 %v1350
      %v1411 = vunpack.c.l.b16 %v1351
      %v1412 = vunpack.c.l.b16 %v1352
      %v1413 = vunpack.c.l.b16 %v1353
      %v1414 = vunpack.c.l.b16 %v1354
      %v1415 = vunpack.c.l.b16 %v1355
      %v1416 = vunpack.c.l.b16 %v1356
      %v1417 = vunpack.c.l.b16 %v1357
      %v1418 = vunpack.c.l.b16 %v1358
      %v1419 = vunpack.c.l.b16 %v1359
      %v1420 = vunpack.c.l.b16 %v1360
      %v1421 = vunpack.c.l.b16 %v1361
      %v1422 = vunpack.c.l.b16 %v1362
      %v1423 = vpack.c.b16 %v1395, %v1394
      %v1424 = vpack.c.b16 %v1397, %v1396
      %v1425 = vpack.c.b16 %v1399, %v1398
      %v1426 = vpack.c.b16 %v1401, %v1400
      %v1427 = vpack.c.b16 %v1403, %v1402
      %v1428 = vpack.c.b16 %v1405, %v1404
      %v1429 = vpack.c.b16 %v1407, %v1406
      %v1430 = vpack.c.b16 %v1409, %v1408
      %v1431 = vpack.c.b16 %v1411, %v1410
      %v1432 = vpack.c.b16 %v1413, %v1412
      %v1433 = vpack.c.b16 %v1415, %v1414
      %v1434 = vpack.c.b16 %v1417, %v1416
      %v1435 = vpack.c.b16 %v1419, %v1418
      %v1436 = vpack.c.b16 %v1421, %v1420
      %v1437 = vpack.c.b16 %v1422, %v1422
      %v1439 = vshrl.u32 %v1423, 16
      %v1441 = vshll.u32 %v1423, 16
      %v1443 = vrot.slane %v1441, 1
      %v1444 = vor.u32 %v1439, %v1443
      %v1446 = vshll.u32 %v1424, 16
      %v1448 = vrot.slane %v1446, 1
      %v1449 = vsel %vm277, %v1444, %v1448
      %v1450 = vshrl.u32 %v1424, 16
      %v1452 = vor.u32 %v1450, %v1448
      %v1454 = vshll.u32 %v1425, 16
      %v1456 = vrot.slane %v1454, 1
      %v1457 = vsel %vm277, %v1452, %v1456
      %v1458 = vshrl.u32 %v1425, 16
      %v1460 = vor.u32 %v1458, %v1456
      %v1462 = vshll.u32 %v1426, 16
      %v1464 = vrot.slane %v1462, 1
      %v1465 = vsel %vm277, %v1460, %v1464
      %v1466 = vshrl.u32 %v1426, 16
      %v1468 = vor.u32 %v1466, %v1464
      %v1470 = vshll.u32 %v1427, 16
      %v1472 = vrot.slane %v1470, 1
      %v1473 = vsel %vm277, %v1468, %v1472
      %v1474 = vshrl.u32 %v1427, 16
      %v1476 = vor.u32 %v1474, %v1472
      %v1478 = vshll.u32 %v1428, 16
      %v1480 = vrot.slane %v1478, 1
      %v1481 = vsel %vm277, %v1476, %v1480
      %v1482 = vshrl.u32 %v1428, 16
      %v1484 = vor.u32 %v1482, %v1480
      %v1486 = vshll.u32 %v1429, 16
      %v1488 = vrot.slane %v1486, 1
      %v1489 = vsel %vm277, %v1484, %v1488
      %v1490 = vshrl.u32 %v1429, 16
      %v1492 = vor.u32 %v1490, %v1488
      %v1494 = vshll.u32 %v1430, 16
      %v1496 = vrot.slane %v1494, 1
      %v1497 = vsel %vm277, %v1492, %v1496
      %v1498 = vshrl.u32 %v1430, 16
      %v1500 = vor.u32 %v1498, %v1496
      %v1502 = vshll.u32 %v1431, 16
      %v1504 = vrot.slane %v1502, 1
      %v1505 = vsel %vm277, %v1500, %v1504
      %v1506 = vshrl.u32 %v1431, 16
      %v1508 = vor.u32 %v1506, %v1504
      %v1510 = vshll.u32 %v1432, 16
      %v1512 = vrot.slane %v1510, 1
      %v1513 = vsel %vm277, %v1508, %v1512
      %v1514 = vshrl.u32 %v1432, 16
      %v1516 = vor.u32 %v1514, %v1512
      %v1518 = vshll.u32 %v1433, 16
      %v1520 = vrot.slane %v1518, 1
      %v1521 = vsel %vm277, %v1516, %v1520
      %v1522 = vshrl.u32 %v1433, 16
      %v1524 = vor.u32 %v1522, %v1520
      %v1526 = vshll.u32 %v1434, 16
      %v1528 = vrot.slane %v1526, 1
      %v1529 = vsel %vm277, %v1524, %v1528
      %v1530 = vshrl.u32 %v1434, 16
      %v1532 = vor.u32 %v1530, %v1528
      %v1534 = vshll.u32 %v1435, 16
      %v1536 = vrot.slane %v1534, 1
      %v1537 = vsel %vm277, %v1532, %v1536
      %v1538 = vshrl.u32 %v1435, 16
      %v1540 = vor.u32 %v1538, %v1536
      %v1542 = vshll.u32 %v1436, 16
      %v1544 = vrot.slane %v1542, 1
      %v1545 = vsel %vm277, %v1540, %v1544
      %v1546 = vshrl.u32 %v1436, 16
      %v1548 = vor.u32 %v1546, %v1544
      %v1550 = vshll.u32 %v1437, 16
      %v1552 = vrot.slane %v1550, 1
      %v1553 = vsel %vm277, %v1548, %v1552
      %v1555 = vsel %vm394, %v1449, 0
      %v1558 = vsel %vm394, %v1457, 0
      %v1561 = vsel %vm394, %v1465, 0
      %v1564 = vsel %vm394, %v1473, 0
      %v1567 = vsel %vm394, %v1481, 0
      %v1570 = vsel %vm394, %v1489, 0
      %v1573 = vsel %vm394, %v1497, 0
      %v1576 = vsel %vm394, %v1505, 0
      %v1579 = vsel %vm394, %v1513, 0
      %v1582 = vsel %vm394, %v1521, 0
      %v1585 = vsel %vm394, %v1529, 0
      %v1588 = vsel %vm394, %v1537, 0
      %v1591 = vsel %vm394, %v1545, 0
      %v1594 = vsel %vm394, %v1553, 0
      %v1597 = vsel %vm437, %v1364, 0
      %1599 = vmatprep.subr.bf16.mxu0 0
      %1600 = vmatpush1.bf16.msra.mxu0 0
      %1601 = vmatprep.subr.bf16.mxu0 0
      %1602 = vmatpush1.bf16.msra.mxu0 0
      %1603 = vmatprep.subr.bf16.mxu0 0
      %1604 = vmatpush1.bf16.msra.mxu0 0
      %1605 = vmatprep.subr.bf16.mxu0 0
      %1606 = vmatpush1.bf16.msra.mxu0 0
      %1607 = vmatprep.subr.bf16.mxu0 0
      %1608 = vmatpush1.bf16.msra.mxu0 0
      %1609 = vmatprep.subr.bf16.mxu0 0
      %1610 = vmatpush1.bf16.msra.mxu0 0
      %1611 = vmatprep.subr.bf16.mxu0 0
      %1612 = vmatpush1.bf16.msra.mxu0 0
      %1613 = vmatprep.subr.bf16.mxu0 0
      %1614 = vmatpush1.bf16.msra.mxu0 %v1597
      %1615 = vmatprep.subr.bf16.mxu0 0
      %1616 = vmatpush2.bf16.msra.mxu0 0
      %1617 = vmatprep.subr.bf16.mxu0 0
      %1618 = vmatpush2.bf16.msra.mxu0 0
      %1619 = vmatprep.subr.bf16.mxu0 0
      %1620 = vmatpush2.bf16.msra.mxu0 0
      %1621 = vmatprep.subr.bf16.mxu0 0
      %1622 = vmatpush2.bf16.msra.mxu0 0
      %1623 = vmatprep.subr.bf16.mxu0 0
      %1624 = vmatpush2.bf16.msra.mxu0 0
      %1625 = vmatprep.subr.bf16.mxu0 0
      %1626 = vmatpush2.bf16.msra.mxu0 0
      %1627 = vmatprep.subr.bf16.mxu0 0
      %1628 = vmatpush2.bf16.msra.mxu0 0
      %1629 = vmatprep.subr.bf16.mxu0 0
      %1630 = vmatpush2.bf16.msra.mxu0 0
      %1631 = vmatprep.mubr.bf16.mxu0 0
      %1632 = vmatmul.mubr.bf16.gmra.mxu0 %v1555
      %v1633 = vpop.f32.mrf.mxu0
      %v1634 = vadd.f32 0.0, %v1633
      %v1635 = vpop.f32.mrf.mxu0
      %v1636 = vpop.f32.mrf.mxu0
      %v1637 = vadd.f32 0.0, %v1636
      %v1638 = vpop.f32.mrf.mxu0
      %1639 = vmatprep.mubr.bf16.mxu0 0
      %1640 = vmatmul.mubr.bf16.gmra.mxu0 %v1558
      %v1641 = vpop.f32.mrf.mxu0
      %v1642 = vadd.f32 0.0, %v1641
      %v1643 = vpop.f32.mrf.mxu0
      %v1644 = vpop.f32.mrf.mxu0
      %v1645 = vadd.f32 0.0, %v1644
      %v1646 = vpop.f32.mrf.mxu0
      %1647 = vmatprep.mubr.bf16.mxu0 0
      %1648 = vmatmul.mubr.bf16.gmra.mxu0 %v1561
      %v1649 = vpop.f32.mrf.mxu0
      %v1650 = vadd.f32 0.0, %v1649
      %v1651 = vpop.f32.mrf.mxu0
      %v1652 = vpop.f32.mrf.mxu0
      %v1653 = vadd.f32 0.0, %v1652
      %v1654 = vpop.f32.mrf.mxu0
      %1655 = vmatprep.mubr.bf16.mxu0 0
      %1656 = vmatmul.mubr.bf16.gmra.mxu0 %v1564
      %v1657 = vpop.f32.mrf.mxu0
      %v1658 = vadd.f32 0.0, %v1657
      %v1659 = vpop.f32.mrf.mxu0
      %v1660 = vpop.f32.mrf.mxu0
      %v1661 = vadd.f32 0.0, %v1660
      %v1662 = vpop.f32.mrf.mxu0
      %1663 = vmatprep.mubr.bf16.mxu0 0
      %1664 = vmatmul.mubr.bf16.gmra.mxu0 %v1567
      %v1665 = vpop.f32.mrf.mxu0
      %v1666 = vadd.f32 0.0, %v1665
      %v1667 = vpop.f32.mrf.mxu0
      %v1668 = vpop.f32.mrf.mxu0
      %v1669 = vadd.f32 0.0, %v1668
      %v1670 = vpop.f32.mrf.mxu0
      %1671 = vmatprep.mubr.bf16.mxu0 0
      %1672 = vmatmul.mubr.bf16.gmra.mxu0 %v1570
      %v1673 = vpop.f32.mrf.mxu0
      %v1674 = vadd.f32 0.0, %v1673
      %v1675 = vpop.f32.mrf.mxu0
      %v1676 = vpop.f32.mrf.mxu0
      %v1677 = vadd.f32 0.0, %v1676
      %v1678 = vpop.f32.mrf.mxu0
      %1679 = vmatprep.mubr.bf16.mxu0 0
      %1680 = vmatmul.mubr.bf16.gmra.mxu0 %v1573
      %v1681 = vpop.f32.mrf.mxu0
      %v1682 = vadd.f32 0.0, %v1681
      %v1683 = vpop.f32.mrf.mxu0
      %v1684 = vpop.f32.mrf.mxu0
      %v1685 = vadd.f32 0.0, %v1684
      %v1686 = vpop.f32.mrf.mxu0
      %1687 = vmatprep.mubr.bf16.mxu0 0
      %1688 = vmatmul.mubr.bf16.gmra.mxu0 %v1576
      %v1689 = vpop.f32.mrf.mxu0
      %v1690 = vadd.f32 0.0, %v1689
      %v1691 = vpop.f32.mrf.mxu0
      %v1692 = vpop.f32.mrf.mxu0
      %v1693 = vadd.f32 0.0, %v1692
      %v1694 = vpop.f32.mrf.mxu0
      %1695 = vmatprep.mubr.bf16.mxu0 0
      %1696 = vmatmul.mubr.bf16.gmra.mxu0 %v1579
      %v1697 = vpop.f32.mrf.mxu0
      %v1698 = vadd.f32 0.0, %v1697
      %v1699 = vpop.f32.mrf.mxu0
      %v1700 = vpop.f32.mrf.mxu0
      %v1701 = vadd.f32 0.0, %v1700
      %v1702 = vpop.f32.mrf.mxu0
      %1703 = vmatprep.mubr.bf16.mxu0 0
      %1704 = vmatmul.mubr.bf16.gmra.mxu0 %v1582
      %v1705 = vpop.f32.mrf.mxu0
      %v1706 = vadd.f32 0.0, %v1705
      %v1707 = vpop.f32.mrf.mxu0
      %v1708 = vpop.f32.mrf.mxu0
      %v1709 = vadd.f32 0.0, %v1708
      %v1710 = vpop.f32.mrf.mxu0
      %1711 = vmatprep.mubr.bf16.mxu0 0
      %1712 = vmatmul.mubr.bf16.gmra.mxu0 %v1585
      %v1713 = vpop.f32.mrf.mxu0
      %v1714 = vadd.f32 0.0, %v1713
      %v1715 = vpop.f32.mrf.mxu0
      %v1716 = vpop.f32.mrf.mxu0
      %v1717 = vadd.f32 0.0, %v1716
      %v1718 = vpop.f32.mrf.mxu0
      %1719 = vmatprep.mubr.bf16.mxu0 0
      %1720 = vmatmul.mubr.bf16.gmra.mxu0 %v1588
      %v1721 = vpop.f32.mrf.mxu0
      %v1722 = vadd.f32 0.0, %v1721
      %v1723 = vpop.f32.mrf.mxu0
      %v1724 = vpop.f32.mrf.mxu0
      %v1725 = vadd.f32 0.0, %v1724
      %v1726 = vpop.f32.mrf.mxu0
      %1727 = vmatprep.mubr.bf16.mxu0 0
      %1728 = vmatmul.mubr.bf16.gmra.mxu0 %v1591
      %v1729 = vpop.f32.mrf.mxu0
      %v1730 = vadd.f32 0.0, %v1729
      %v1731 = vpop.f32.mrf.mxu0
      %v1732 = vpop.f32.mrf.mxu0
      %v1733 = vadd.f32 0.0, %v1732
      %v1734 = vpop.f32.mrf.mxu0
      %1735 = vmatprep.mubr.bf16.mxu0 0
      %1736 = vmatmul.mubr.bf16.gmra.mxu0 %v1594
      %v1737 = vpop.f32.mrf.mxu0
      %v1738 = vadd.f32 0.0, %v1737
      %v1739 = vpop.f32.mrf.mxu0
      %v1740 = vpop.f32.mrf.mxu0
      %v1741 = vadd.f32 0.0, %v1740
      %v1742 = vpop.f32.mrf.mxu0
      %1743 = vdwg.mxu0
      %v1744 = vadd.f32 %v1306, %v1634
      %v1745 = vadd.f32 %v1307, %v1637
      %v1746 = vadd.f32 %v1308, %v1642
      %v1747 = vadd.f32 %v1309, %v1645
      %v1748 = vadd.f32 %v1310, %v1650
      %v1749 = vadd.f32 %v1311, %v1653
      %v1750 = vadd.f32 %v1312, %v1658
      %v1751 = vadd.f32 %v1313, %v1661
      %v1752 = vadd.f32 %v1314, %v1666
      %v1753 = vadd.f32 %v1315, %v1669
      %v1754 = vadd.f32 %v1316, %v1674
      %v1755 = vadd.f32 %v1317, %v1677
      %v1756 = vadd.f32 %v1318, %v1682
      %v1757 = vadd.f32 %v1319, %v1685
      %v1758 = vadd.f32 %v1320, %v1690
      %v1759 = vadd.f32 %v1321, %v1693
      %v1760 = vadd.f32 %v1322, %v1698
      %v1761 = vadd.f32 %v1323, %v1701
      %v1762 = vadd.f32 %v1324, %v1706
      %v1763 = vadd.f32 %v1325, %v1709
      %v1764 = vadd.f32 %v1326, %v1714
      %v1765 = vadd.f32 %v1327, %v1717
      %v1766 = vadd.f32 %v1328, %v1722
      %v1767 = vadd.f32 %v1329, %v1725
      %v1768 = vadd.f32 %v1330, %v1730
      %v1769 = vadd.f32 %v1331, %v1733
      %v1770 = vadd.f32 %v1332, %v1738
      %v1771 = vadd.f32 %v1333, %v1741
      %v1772 = vld [vmem:[%s165 + $0x8] sm:$0xe]
      %s1773 = scalar_lea.vmem %s1, 10
      %v1774 = vld [vmem:[%s1773] sm:$0x3]
      %v1776 = vunpack.c.l.b16 %v1772
      %v1777 = vpack.c.b16 %v1395, %v1776
      %v1778 = vrot.slane %v1777, 1
      %v1779 = vrot.slane %v1424, 1
      %v1780 = vsel %vm768, %v1778, %v1779
      %v1781 = vrot.slane %v1425, 1
      %v1782 = vsel %vm768, %v1779, %v1781
      %v1783 = vrot.slane %v1426, 1
      %v1784 = vsel %vm768, %v1781, %v1783
      %v1785 = vrot.slane %v1427, 1
      %v1786 = vsel %vm768, %v1783, %v1785
      %v1787 = vrot.slane %v1428, 1
      %v1788 = vsel %vm768, %v1785, %v1787
      %v1789 = vrot.slane %v1429, 1
      %v1790 = vsel %vm768, %v1787, %v1789
      %v1791 = vrot.slane %v1430, 1
      %v1792 = vsel %vm768, %v1789, %v1791
      %v1793 = vrot.slane %v1431, 1
      %v1794 = vsel %vm768, %v1791, %v1793
      %v1795 = vrot.slane %v1432, 1
      %v1796 = vsel %vm768, %v1793, %v1795
      %v1797 = vrot.slane %v1433, 1
      %v1798 = vsel %vm768, %v1795, %v1797
      %v1799 = vrot.slane %v1434, 1
      %v1800 = vsel %vm768, %v1797, %v1799
      %v1801 = vrot.slane %v1435, 1
      %v1802 = vsel %vm768, %v1799, %v1801
      %v1803 = vrot.slane %v1436, 1
      %v1804 = vsel %vm768, %v1801, %v1803
      %v1805 = vrot.slane %v1437, 1
      %v1806 = vsel %vm768, %v1803, %v1805
      %v1808 = vsel %vm394, %v1780, 0
      %v1811 = vsel %vm394, %v1782, 0
      %v1814 = vsel %vm394, %v1784, 0
      %v1817 = vsel %vm394, %v1786, 0
      %v1820 = vsel %vm394, %v1788, 0
      %v1823 = vsel %vm394, %v1790, 0
      %v1826 = vsel %vm394, %v1792, 0
      %v1829 = vsel %vm394, %v1794, 0
      %v1832 = vsel %vm394, %v1796, 0
      %v1835 = vsel %vm394, %v1798, 0
      %v1838 = vsel %vm394, %v1800, 0
      %v1841 = vsel %vm394, %v1802, 0
      %v1844 = vsel %vm394, %v1804, 0
      %v1847 = vsel %vm394, %v1806, 0
      %v1850 = vsel %vm437, %v1774, 0
      %1852 = vmatprep.subr.bf16.mxu0 0
      %1853 = vmatpush1.bf16.msra.mxu0 0
      %1854 = vmatprep.subr.bf16.mxu0 0
      %1855 = vmatpush1.bf16.msra.mxu0 0
      %1856 = vmatprep.subr.bf16.mxu0 0
      %1857 = vmatpush1.bf16.msra.mxu0 0
      %1858 = vmatprep.subr.bf16.mxu0 0
      %1859 = vmatpush1.bf16.msra.mxu0 0
      %1860 = vmatprep.subr.bf16.mxu0 0
      %1861 = vmatpush1.bf16.msra.mxu0 0
      %1862 = vmatprep.subr.bf16.mxu0 0
      %1863 = vmatpush1.bf16.msra.mxu0 0
      %1864 = vmatprep.subr.bf16.mxu0 0
      %1865 = vmatpush1.bf16.msra.mxu0 0
      %1866 = vmatprep.subr.bf16.mxu0 0
      %1867 = vmatpush1.bf16.msra.mxu0 %v1850
      %1868 = vmatprep.subr.bf16.mxu0 0
      %1869 = vmatpush2.bf16.msra.mxu0 0
      %1870 = vmatprep.subr.bf16.mxu0 0
      %1871 = vmatpush2.bf16.msra.mxu0 0
      %1872 = vmatprep.subr.bf16.mxu0 0
      %1873 = vmatpush2.bf16.msra.mxu0 0
      %1874 = vmatprep.subr.bf16.mxu0 0
      %1875 = vmatpush2.bf16.msra.mxu0 0
      %1876 = vmatprep.subr.bf16.mxu0 0
      %1877 = vmatpush2.bf16.msra.mxu0 0
      %1878 = vmatprep.subr.bf16.mxu0 0
      %1879 = vmatpush2.bf16.msra.mxu0 0
      %1880 = vmatprep.subr.bf16.mxu0 0
      %1881 = vmatpush2.bf16.msra.mxu0 0
      %1882 = vmatprep.subr.bf16.mxu0 0
      %1883 = vmatpush2.bf16.msra.mxu0 0
      %1884 = vmatprep.mubr.bf16.mxu0 0
      %1885 = vmatmul.mubr.bf16.gmra.mxu0 %v1808
      %v1886 = vpop.f32.mrf.mxu0
      %v1887 = vadd.f32 0.0, %v1886
      %v1888 = vpop.f32.mrf.mxu0
      %v1889 = vpop.f32.mrf.mxu0
      %v1890 = vadd.f32 0.0, %v1889
      %v1891 = vpop.f32.mrf.mxu0
      %1892 = vmatprep.mubr.bf16.mxu0 0
      %1893 = vmatmul.mubr.bf16.gmra.mxu0 %v1811
      %v1894 = vpop.f32.mrf.mxu0
      %v1895 = vadd.f32 0.0, %v1894
      %v1896 = vpop.f32.mrf.mxu0
      %v1897 = vpop.f32.mrf.mxu0
      %v1898 = vadd.f32 0.0, %v1897
      %v1899 = vpop.f32.mrf.mxu0
      %1900 = vmatprep.mubr.bf16.mxu0 0
      %1901 = vmatmul.mubr.bf16.gmra.mxu0 %v1814
      %v1902 = vpop.f32.mrf.mxu0
      %v1903 = vadd.f32 0.0, %v1902
      %v1904 = vpop.f32.mrf.mxu0
      %v1905 = vpop.f32.mrf.mxu0
      %v1906 = vadd.f32 0.0, %v1905
      %v1907 = vpop.f32.mrf.mxu0
      %1908 = vmatprep.mubr.bf16.mxu0 0
      %1909 = vmatmul.mubr.bf16.gmra.mxu0 %v1817
      %v1910 = vpop.f32.mrf.mxu0
      %v1911 = vadd.f32 0.0, %v1910
      %v1912 = vpop.f32.mrf.mxu0
      %v1913 = vpop.f32.mrf.mxu0
      %v1914 = vadd.f32 0.0, %v1913
      %v1915 = vpop.f32.mrf.mxu0
      %1916 = vmatprep.mubr.bf16.mxu0 0
      %1917 = vmatmul.mubr.bf16.gmra.mxu0 %v1820
      %v1918 = vpop.f32.mrf.mxu0
      %v1919 = vadd.f32 0.0, %v1918
      %v1920 = vpop.f32.mrf.mxu0
      %v1921 = vpop.f32.mrf.mxu0
      %v1922 = vadd.f32 0.0, %v1921
      %v1923 = vpop.f32.mrf.mxu0
      %1924 = vmatprep.mubr.bf16.mxu0 0
      %1925 = vmatmul.mubr.bf16.gmra.mxu0 %v1823
      %v1926 = vpop.f32.mrf.mxu0
      %v1927 = vadd.f32 0.0, %v1926
      %v1928 = vpop.f32.mrf.mxu0
      %v1929 = vpop.f32.mrf.mxu0
      %v1930 = vadd.f32 0.0, %v1929
      %v1931 = vpop.f32.mrf.mxu0
      %1932 = vmatprep.mubr.bf16.mxu0 0
      %1933 = vmatmul.mubr.bf16.gmra.mxu0 %v1826
      %v1934 = vpop.f32.mrf.mxu0
      %v1935 = vadd.f32 0.0, %v1934
      %v1936 = vpop.f32.mrf.mxu0
      %v1937 = vpop.f32.mrf.mxu0
      %v1938 = vadd.f32 0.0, %v1937
      %v1939 = vpop.f32.mrf.mxu0
      %1940 = vmatprep.mubr.bf16.mxu0 0
      %1941 = vmatmul.mubr.bf16.gmra.mxu0 %v1829
      %v1942 = vpop.f32.mrf.mxu0
      %v1943 = vadd.f32 0.0, %v1942
      %v1944 = vpop.f32.mrf.mxu0
      %v1945 = vpop.f32.mrf.mxu0
      %v1946 = vadd.f32 0.0, %v1945
      %v1947 = vpop.f32.mrf.mxu0
      %1948 = vmatprep.mubr.bf16.mxu0 0
      %1949 = vmatmul.mubr.bf16.gmra.mxu0 %v1832
      %v1950 = vpop.f32.mrf.mxu0
      %v1951 = vadd.f32 0.0, %v1950
      %v1952 = vpop.f32.mrf.mxu0
      %v1953 = vpop.f32.mrf.mxu0
      %v1954 = vadd.f32 0.0, %v1953
      %v1955 = vpop.f32.mrf.mxu0
      %1956 = vmatprep.mubr.bf16.mxu0 0
      %1957 = vmatmul.mubr.bf16.gmra.mxu0 %v1835
      %v1958 = vpop.f32.mrf.mxu0
      %v1959 = vadd.f32 0.0, %v1958
      %v1960 = vpop.f32.mrf.mxu0
      %v1961 = vpop.f32.mrf.mxu0
      %v1962 = vadd.f32 0.0, %v1961
      %v1963 = vpop.f32.mrf.mxu0
      %1964 = vmatprep.mubr.bf16.mxu0 0
      %1965 = vmatmul.mubr.bf16.gmra.mxu0 %v1838
      %v1966 = vpop.f32.mrf.mxu0
      %v1967 = vadd.f32 0.0, %v1966
      %v1968 = vpop.f32.mrf.mxu0
      %v1969 = vpop.f32.mrf.mxu0
      %v1970 = vadd.f32 0.0, %v1969
      %v1971 = vpop.f32.mrf.mxu0
      %1972 = vmatprep.mubr.bf16.mxu0 0
      %1973 = vmatmul.mubr.bf16.gmra.mxu0 %v1841
      %v1974 = vpop.f32.mrf.mxu0
      %v1975 = vadd.f32 0.0, %v1974
      %v1976 = vpop.f32.mrf.mxu0
      %v1977 = vpop.f32.mrf.mxu0
      %v1978 = vadd.f32 0.0, %v1977
      %v1979 = vpop.f32.mrf.mxu0
      %1980 = vmatprep.mubr.bf16.mxu0 0
      %1981 = vmatmul.mubr.bf16.gmra.mxu0 %v1844
      %v1982 = vpop.f32.mrf.mxu0
      %v1983 = vadd.f32 0.0, %v1982
      %v1984 = vpop.f32.mrf.mxu0
      %v1985 = vpop.f32.mrf.mxu0
      %v1986 = vadd.f32 0.0, %v1985
      %v1987 = vpop.f32.mrf.mxu0
      %1988 = vmatprep.mubr.bf16.mxu0 0
      %1989 = vmatmul.mubr.bf16.gmra.mxu0 %v1847
      %v1990 = vpop.f32.mrf.mxu0
      %v1991 = vadd.f32 0.0, %v1990
      %v1992 = vpop.f32.mrf.mxu0
      %v1993 = vpop.f32.mrf.mxu0
      %v1994 = vadd.f32 0.0, %v1993
      %v1995 = vpop.f32.mrf.mxu0
      %1996 = vdwg.mxu0
      %v1997 = vadd.f32 %v1744, %v1887
      %v1998 = vadd.f32 %v1745, %v1890
      %v1999 = vadd.f32 %v1746, %v1895
      %v2000 = vadd.f32 %v1747, %v1898
      %v2001 = vadd.f32 %v1748, %v1903
      %v2002 = vadd.f32 %v1749, %v1906
      %v2003 = vadd.f32 %v1750, %v1911
      %v2004 = vadd.f32 %v1751, %v1914
      %v2005 = vadd.f32 %v1752, %v1919
      %v2006 = vadd.f32 %v1753, %v1922
      %v2007 = vadd.f32 %v1754, %v1927
      %v2008 = vadd.f32 %v1755, %v1930
      %v2009 = vadd.f32 %v1756, %v1935
      %v2010 = vadd.f32 %v1757, %v1938
      %v2011 = vadd.f32 %v1758, %v1943
      %v2012 = vadd.f32 %v1759, %v1946
      %v2013 = vadd.f32 %v1760, %v1951
      %v2014 = vadd.f32 %v1761, %v1954
      %v2015 = vadd.f32 %v1762, %v1959
      %v2016 = vadd.f32 %v1763, %v1962
      %v2017 = vadd.f32 %v1764, %v1967
      %v2018 = vadd.f32 %v1765, %v1970
      %v2019 = vadd.f32 %v1766, %v1975
      %v2020 = vadd.f32 %v1767, %v1978
      %v2021 = vadd.f32 %v1768, %v1983
      %v2022 = vadd.f32 %v1769, %v1986
      %v2023 = vadd.f32 %v1770, %v1991
      %v2024 = vadd.f32 %v1771, %v1994
      %v2025 = vld [vmem:[%s165 + $0x10] sm:$0xf]
      %v2026 = vld [vmem:[%s165 + $0x14] sm:$0xf]
      %v2027 = vld [vmem:[%s165 + $0x18] sm:$0xf]
      %v2028 = vld [vmem:[%s165 + $0x1c] sm:$0xf]
      %v2029 = vld [vmem:[%s165 + $0x20] sm:$0xf]
      %v2030 = vld [vmem:[%s165 + $0x24] sm:$0xf]
      %v2031 = vld [vmem:[%s165 + $0x28] sm:$0xf]
      %v2032 = vld [vmem:[%s165 + $0x2c] sm:$0xf]
      %v2033 = vld [vmem:[%s165 + $0x30] sm:$0xf]
      %v2034 = vld [vmem:[%s165 + $0x34] sm:$0xf]
      %v2035 = vld [vmem:[%s165 + $0x38] sm:$0xf]
      %v2036 = vld [vmem:[%s165 + $0x3c] sm:$0xf]
      %v2037 = vld [vmem:[%s165 + $0x40] sm:$0xf]
      %v2038 = vld [vmem:[%s165 + $0x44] sm:$0xf]
      %v2039 = vld [vmem:[%s165 + $0x48] sm:$0xf]
      %v2040 = vld [vmem:[%s165 + $0x4c] sm:$0xf]
      %v2041 = vld [vmem:[%s165 + $0x50] sm:$0xf]
      %v2042 = vld [vmem:[%s165 + $0x54] sm:$0xf]
      %v2043 = vld [vmem:[%s165 + $0x58] sm:$0xf]
      %v2044 = vld [vmem:[%s165 + $0x5c] sm:$0xf]
      %v2045 = vld [vmem:[%s165 + $0x60] sm:$0xf]
      %v2046 = vld [vmem:[%s165 + $0x64] sm:$0xf]
      %v2047 = vld [vmem:[%s165 + $0x68] sm:$0xf]
      %v2048 = vld [vmem:[%s165 + $0x6c] sm:$0xf]
      %v2049 = vld [vmem:[%s165 + $0x70] sm:$0xf]
      %v2050 = vld [vmem:[%s165 + $0x74] sm:$0xf]
      %v2051 = vld [vmem:[%s165 + $0x78] sm:$0xf]
      %v2052 = vld [vmem:[%s165 + $0x7c] sm:$0xf]
      %s2053 = scalar_lea.vmem %s1, 12
      %v2054 = vld [vmem:[%s2053] sm:$0x3]
      %v2083 = vunpack.c.l.b16 %v2025
      %v2084 = vunpack.c.l.b16 %v2026
      %v2085 = vunpack.c.l.b16 %v2027
      %v2086 = vunpack.c.l.b16 %v2028
      %v2087 = vunpack.c.l.b16 %v2029
      %v2088 = vunpack.c.l.b16 %v2030
      %v2089 = vunpack.c.l.b16 %v2031
      %v2090 = vunpack.c.l.b16 %v2032
      %v2091 = vunpack.c.l.b16 %v2033
      %v2092 = vunpack.c.l.b16 %v2034
      %v2093 = vunpack.c.l.b16 %v2035
      %v2094 = vunpack.c.l.b16 %v2036
      %v2095 = vunpack.c.l.b16 %v2037
      %v2096 = vunpack.c.l.b16 %v2038
      %v2097 = vunpack.c.l.b16 %v2039
      %v2098 = vunpack.c.l.b16 %v2040
      %v2099 = vunpack.c.l.b16 %v2041
      %v2100 = vunpack.c.l.b16 %v2042
      %v2101 = vunpack.c.l.b16 %v2043
      %v2102 = vunpack.c.l.b16 %v2044
      %v2103 = vunpack.c.l.b16 %v2045
      %v2104 = vunpack.c.l.b16 %v2046
      %v2105 = vunpack.c.l.b16 %v2047
      %v2106 = vunpack.c.l.b16 %v2048
      %v2107 = vunpack.c.l.b16 %v2049
      %v2108 = vunpack.c.l.b16 %v2050
      %v2109 = vunpack.c.l.b16 %v2051
      %v2110 = vunpack.c.l.b16 %v2052
      %v2111 = vpack.c.b16 %v2084, %v2083
      %v2112 = vpack.c.b16 %v2086, %v2085
      %v2113 = vpack.c.b16 %v2088, %v2087
      %v2114 = vpack.c.b16 %v2090, %v2089
      %v2115 = vpack.c.b16 %v2092, %v2091
      %v2116 = vpack.c.b16 %v2094, %v2093
      %v2117 = vpack.c.b16 %v2096, %v2095
      %v2118 = vpack.c.b16 %v2098, %v2097
      %v2119 = vpack.c.b16 %v2100, %v2099
      %v2120 = vpack.c.b16 %v2102, %v2101
      %v2121 = vpack.c.b16 %v2104, %v2103
      %v2122 = vpack.c.b16 %v2106, %v2105
      %v2123 = vpack.c.b16 %v2108, %v2107
      %v2124 = vpack.c.b16 %v2110, %v2109
      %v2126 = vsel %vm394, %v2111, 0
      %v2129 = vsel %vm394, %v2112, 0
      %v2132 = vsel %vm394, %v2113, 0
      %v2135 = vsel %vm394, %v2114, 0
      %v2138 = vsel %vm394, %v2115, 0
      %v2141 = vsel %vm394, %v2116, 0
      %v2144 = vsel %vm394, %v2117, 0
      %v2147 = vsel %vm394, %v2118, 0
      %v2150 = vsel %vm394, %v2119, 0
      %v2153 = vsel %vm394, %v2120, 0
      %v2156 = vsel %vm394, %v2121, 0
      %v2159 = vsel %vm394, %v2122, 0
      %v2162 = vsel %vm394, %v2123, 0
      %v2165 = vsel %vm394, %v2124, 0
      %v2168 = vsel %vm437, %v2054, 0
      %2170 = vmatprep.subr.bf16.mxu0 0
      %2171 = vmatpush1.bf16.msra.mxu0 0
      %2172 = vmatprep.subr.bf16.mxu0 0
      %2173 = vmatpush1.bf16.msra.mxu0 0
      %2174 = vmatprep.subr.bf16.mxu0 0
      %2175 = vmatpush1.bf16.msra.mxu0 0
      %2176 = vmatprep.subr.bf16.mxu0 0
      %2177 = vmatpush1.bf16.msra.mxu0 0
      %2178 = vmatprep.subr.bf16.mxu0 0
      %2179 = vmatpush1.bf16.msra.mxu0 0
      %2180 = vmatprep.subr.bf16.mxu0 0
      %2181 = vmatpush1.bf16.msra.mxu0 0
      %2182 = vmatprep.subr.bf16.mxu0 0
      %2183 = vmatpush1.bf16.msra.mxu0 0
      %2184 = vmatprep.subr.bf16.mxu0 0
      %2185 = vmatpush1.bf16.msra.mxu0 %v2168
      %2186 = vmatprep.subr.bf16.mxu0 0
      %2187 = vmatpush2.bf16.msra.mxu0 0
      %2188 = vmatprep.subr.bf16.mxu0 0
      %2189 = vmatpush2.bf16.msra.mxu0 0
      %2190 = vmatprep.subr.bf16.mxu0 0
      %2191 = vmatpush2.bf16.msra.mxu0 0
      %2192 = vmatprep.subr.bf16.mxu0 0
      %2193 = vmatpush2.bf16.msra.mxu0 0
      %2194 = vmatprep.subr.bf16.mxu0 0
      %2195 = vmatpush2.bf16.msra.mxu0 0
      %2196 = vmatprep.subr.bf16.mxu0 0
      %2197 = vmatpush2.bf16.msra.mxu0 0
      %2198 = vmatprep.subr.bf16.mxu0 0
      %2199 = vmatpush2.bf16.msra.mxu0 0
      %2200 = vmatprep.subr.bf16.mxu0 0
      %2201 = vmatpush2.bf16.msra.mxu0 0
      %2202 = vmatprep.mubr.bf16.mxu0 0
      %2203 = vmatmul.mubr.bf16.gmra.mxu0 %v2126
      %v2204 = vpop.f32.mrf.mxu0
      %v2205 = vadd.f32 0.0, %v2204
      %v2206 = vpop.f32.mrf.mxu0
      %v2207 = vpop.f32.mrf.mxu0
      %v2208 = vadd.f32 0.0, %v2207
      %v2209 = vpop.f32.mrf.mxu0
      %2210 = vmatprep.mubr.bf16.mxu0 0
      %2211 = vmatmul.mubr.bf16.gmra.mxu0 %v2129
      %v2212 = vpop.f32.mrf.mxu0
      %v2213 = vadd.f32 0.0, %v2212
      %v2214 = vpop.f32.mrf.mxu0
      %v2215 = vpop.f32.mrf.mxu0
      %v2216 = vadd.f32 0.0, %v2215
      %v2217 = vpop.f32.mrf.mxu0
      %2218 = vmatprep.mubr.bf16.mxu0 0
      %2219 = vmatmul.mubr.bf16.gmra.mxu0 %v2132
      %v2220 = vpop.f32.mrf.mxu0
      %v2221 = vadd.f32 0.0, %v2220
      %v2222 = vpop.f32.mrf.mxu0
      %v2223 = vpop.f32.mrf.mxu0
      %v2224 = vadd.f32 0.0, %v2223
      %v2225 = vpop.f32.mrf.mxu0
      %2226 = vmatprep.mubr.bf16.mxu0 0
      %2227 = vmatmul.mubr.bf16.gmra.mxu0 %v2135
      %v2228 = vpop.f32.mrf.mxu0
      %v2229 = vadd.f32 0.0, %v2228
      %v2230 = vpop.f32.mrf.mxu0
      %v2231 = vpop.f32.mrf.mxu0
      %v2232 = vadd.f32 0.0, %v2231
      %v2233 = vpop.f32.mrf.mxu0
      %2234 = vmatprep.mubr.bf16.mxu0 0
      %2235 = vmatmul.mubr.bf16.gmra.mxu0 %v2138
      %v2236 = vpop.f32.mrf.mxu0
      %v2237 = vadd.f32 0.0, %v2236
      %v2238 = vpop.f32.mrf.mxu0
      %v2239 = vpop.f32.mrf.mxu0
      %v2240 = vadd.f32 0.0, %v2239
      %v2241 = vpop.f32.mrf.mxu0
      %2242 = vmatprep.mubr.bf16.mxu0 0
      %2243 = vmatmul.mubr.bf16.gmra.mxu0 %v2141
      %v2244 = vpop.f32.mrf.mxu0
      %v2245 = vadd.f32 0.0, %v2244
      %v2246 = vpop.f32.mrf.mxu0
      %v2247 = vpop.f32.mrf.mxu0
      %v2248 = vadd.f32 0.0, %v2247
      %v2249 = vpop.f32.mrf.mxu0
      %2250 = vmatprep.mubr.bf16.mxu0 0
      %2251 = vmatmul.mubr.bf16.gmra.mxu0 %v2144
      %v2252 = vpop.f32.mrf.mxu0
      %v2253 = vadd.f32 0.0, %v2252
      %v2254 = vpop.f32.mrf.mxu0
      %v2255 = vpop.f32.mrf.mxu0
      %v2256 = vadd.f32 0.0, %v2255
      %v2257 = vpop.f32.mrf.mxu0
      %2258 = vmatprep.mubr.bf16.mxu0 0
      %2259 = vmatmul.mubr.bf16.gmra.mxu0 %v2147
      %v2260 = vpop.f32.mrf.mxu0
      %v2261 = vadd.f32 0.0, %v2260
      %v2262 = vpop.f32.mrf.mxu0
      %v2263 = vpop.f32.mrf.mxu0
      %v2264 = vadd.f32 0.0, %v2263
      %v2265 = vpop.f32.mrf.mxu0
      %2266 = vmatprep.mubr.bf16.mxu0 0
      %2267 = vmatmul.mubr.bf16.gmra.mxu0 %v2150
      %v2268 = vpop.f32.mrf.mxu0
      %v2269 = vadd.f32 0.0, %v2268
      %v2270 = vpop.f32.mrf.mxu0
      %v2271 = vpop.f32.mrf.mxu0
      %v2272 = vadd.f32 0.0, %v2271
      %v2273 = vpop.f32.mrf.mxu0
      %2274 = vmatprep.mubr.bf16.mxu0 0
      %2275 = vmatmul.mubr.bf16.gmra.mxu0 %v2153
      %v2276 = vpop.f32.mrf.mxu0
      %v2277 = vadd.f32 0.0, %v2276
      %v2278 = vpop.f32.mrf.mxu0
      %v2279 = vpop.f32.mrf.mxu0
      %v2280 = vadd.f32 0.0, %v2279
      %v2281 = vpop.f32.mrf.mxu0
      %2282 = vmatprep.mubr.bf16.mxu0 0
      %2283 = vmatmul.mubr.bf16.gmra.mxu0 %v2156
      %v2284 = vpop.f32.mrf.mxu0
      %v2285 = vadd.f32 0.0, %v2284
      %v2286 = vpop.f32.mrf.mxu0
      %v2287 = vpop.f32.mrf.mxu0
      %v2288 = vadd.f32 0.0, %v2287
      %v2289 = vpop.f32.mrf.mxu0
      %2290 = vmatprep.mubr.bf16.mxu0 0
      %2291 = vmatmul.mubr.bf16.gmra.mxu0 %v2159
      %v2292 = vpop.f32.mrf.mxu0
      %v2293 = vadd.f32 0.0, %v2292
      %v2294 = vpop.f32.mrf.mxu0
      %v2295 = vpop.f32.mrf.mxu0
      %v2296 = vadd.f32 0.0, %v2295
      %v2297 = vpop.f32.mrf.mxu0
      %2298 = vmatprep.mubr.bf16.mxu0 0
      %2299 = vmatmul.mubr.bf16.gmra.mxu0 %v2162
      %v2300 = vpop.f32.mrf.mxu0
      %v2301 = vadd.f32 0.0, %v2300
      %v2302 = vpop.f32.mrf.mxu0
      %v2303 = vpop.f32.mrf.mxu0
      %v2304 = vadd.f32 0.0, %v2303
      %v2305 = vpop.f32.mrf.mxu0
      %2306 = vmatprep.mubr.bf16.mxu0 0
      %2307 = vmatmul.mubr.bf16.gmra.mxu0 %v2165
      %v2308 = vpop.f32.mrf.mxu0
      %v2309 = vadd.f32 0.0, %v2308
      %v2310 = vpop.f32.mrf.mxu0
      %v2311 = vpop.f32.mrf.mxu0
      %v2312 = vadd.f32 0.0, %v2311
      %v2313 = vpop.f32.mrf.mxu0
      %2314 = vdwg.mxu0
      %v2315 = vadd.f32 %v1997, %v2205
      %v2316 = vadd.f32 %v1998, %v2208
      %v2317 = vadd.f32 %v1999, %v2213
      %v2318 = vadd.f32 %v2000, %v2216
      %v2319 = vadd.f32 %v2001, %v2221
      %v2320 = vadd.f32 %v2002, %v2224
      %v2321 = vadd.f32 %v2003, %v2229
      %v2322 = vadd.f32 %v2004, %v2232
      %v2323 = vadd.f32 %v2005, %v2237
      %v2324 = vadd.f32 %v2006, %v2240
      %v2325 = vadd.f32 %v2007, %v2245
      %v2326 = vadd.f32 %v2008, %v2248
      %v2327 = vadd.f32 %v2009, %v2253
      %v2328 = vadd.f32 %v2010, %v2256
      %v2329 = vadd.f32 %v2011, %v2261
      %v2330 = vadd.f32 %v2012, %v2264
      %v2331 = vadd.f32 %v2013, %v2269
      %v2332 = vadd.f32 %v2014, %v2272
      %v2333 = vadd.f32 %v2015, %v2277
      %v2334 = vadd.f32 %v2016, %v2280
      %v2335 = vadd.f32 %v2017, %v2285
      %v2336 = vadd.f32 %v2018, %v2288
      %v2337 = vadd.f32 %v2019, %v2293
      %v2338 = vadd.f32 %v2020, %v2296
      %v2339 = vadd.f32 %v2021, %v2301
      %v2340 = vadd.f32 %v2022, %v2304
      %v2341 = vadd.f32 %v2023, %v2309
      %v2342 = vadd.f32 %v2024, %v2312
      %v2343 = vld [vmem:[%s165 + $0x10] sm:$0xf]
      %v2344 = vld [vmem:[%s165 + $0x14] sm:$0xf]
      %v2345 = vld [vmem:[%s165 + $0x18] sm:$0xf]
      %v2346 = vld [vmem:[%s165 + $0x1c] sm:$0xf]
      %v2347 = vld [vmem:[%s165 + $0x20] sm:$0xf]
      %v2348 = vld [vmem:[%s165 + $0x24] sm:$0xf]
      %v2349 = vld [vmem:[%s165 + $0x28] sm:$0xf]
      %v2350 = vld [vmem:[%s165 + $0x2c] sm:$0xf]
      %v2351 = vld [vmem:[%s165 + $0x30] sm:$0xf]
      %v2352 = vld [vmem:[%s165 + $0x34] sm:$0xf]
      %v2353 = vld [vmem:[%s165 + $0x38] sm:$0xf]
      %v2354 = vld [vmem:[%s165 + $0x3c] sm:$0xf]
      %v2355 = vld [vmem:[%s165 + $0x40] sm:$0xf]
      %v2356 = vld [vmem:[%s165 + $0x44] sm:$0xf]
      %v2357 = vld [vmem:[%s165 + $0x48] sm:$0xf]
      %v2358 = vld [vmem:[%s165 + $0x4c] sm:$0xf]
      %v2359 = vld [vmem:[%s165 + $0x50] sm:$0xf]
      %v2360 = vld [vmem:[%s165 + $0x54] sm:$0xf]
      %v2361 = vld [vmem:[%s165 + $0x58] sm:$0xf]
      %v2362 = vld [vmem:[%s165 + $0x5c] sm:$0xf]
      %v2363 = vld [vmem:[%s165 + $0x60] sm:$0xf]
      %v2364 = vld [vmem:[%s165 + $0x64] sm:$0xf]
      %v2365 = vld [vmem:[%s165 + $0x68] sm:$0xf]
      %v2366 = vld [vmem:[%s165 + $0x6c] sm:$0xf]
      %v2367 = vld [vmem:[%s165 + $0x70] sm:$0xf]
      %v2368 = vld [vmem:[%s165 + $0x74] sm:$0xf]
      %v2369 = vld [vmem:[%s165 + $0x78] sm:$0xf]
      %v2370 = vld [vmem:[%s165 + $0x7c] sm:$0xf]
      %v2371 = vld [vmem:[%s165 + $0x80] sm:$0x1]
      %s2372 = scalar_lea.vmem %s1, 14
      %v2373 = vld [vmem:[%s2372] sm:$0x3]
      %v2403 = vunpack.c.l.b16 %v2343
      %v2404 = vunpack.c.l.b16 %v2344
      %v2405 = vunpack.c.l.b16 %v2345
      %v2406 = vunpack.c.l.b16 %v2346
      %v2407 = vunpack.c.l.b16 %v2347
      %v2408 = vunpack.c.l.b16 %v2348
      %v2409 = vunpack.c.l.b16 %v2349
      %v2410 = vunpack.c.l.b16 %v2350
      %v2411 = vunpack.c.l.b16 %v2351
      %v2412 = vunpack.c.l.b16 %v2352
      %v2413 = vunpack.c.l.b16 %v2353
      %v2414 = vunpack.c.l.b16 %v2354
      %v2415 = vunpack.c.l.b16 %v2355
      %v2416 = vunpack.c.l.b16 %v2356
      %v2417 = vunpack.c.l.b16 %v2357
      %v2418 = vunpack.c.l.b16 %v2358
      %v2419 = vunpack.c.l.b16 %v2359
      %v2420 = vunpack.c.l.b16 %v2360
      %v2421 = vunpack.c.l.b16 %v2361
      %v2422 = vunpack.c.l.b16 %v2362
      %v2423 = vunpack.c.l.b16 %v2363
      %v2424 = vunpack.c.l.b16 %v2364
      %v2425 = vunpack.c.l.b16 %v2365
      %v2426 = vunpack.c.l.b16 %v2366
      %v2427 = vunpack.c.l.b16 %v2367
      %v2428 = vunpack.c.l.b16 %v2368
      %v2429 = vunpack.c.l.b16 %v2369
      %v2430 = vunpack.c.l.b16 %v2370
      %v2431 = vunpack.c.l.b16 %v2371
      %v2432 = vpack.c.b16 %v2404, %v2403
      %v2433 = vpack.c.b16 %v2406, %v2405
      %v2434 = vpack.c.b16 %v2408, %v2407
      %v2435 = vpack.c.b16 %v2410, %v2409
      %v2436 = vpack.c.b16 %v2412, %v2411
      %v2437 = vpack.c.b16 %v2414, %v2413
      %v2438 = vpack.c.b16 %v2416, %v2415
      %v2439 = vpack.c.b16 %v2418, %v2417
      %v2440 = vpack.c.b16 %v2420, %v2419
      %v2441 = vpack.c.b16 %v2422, %v2421
      %v2442 = vpack.c.b16 %v2424, %v2423
      %v2443 = vpack.c.b16 %v2426, %v2425
      %v2444 = vpack.c.b16 %v2428, %v2427
      %v2445 = vpack.c.b16 %v2430, %v2429
      %v2446 = vpack.c.b16 %v2431, %v2431
      %v2448 = vshrl.u32 %v2432, 16
      %v2450 = vshll.u32 %v2432, 16
      %v2452 = vrot.slane %v2450, 1
      %v2453 = vor.u32 %v2448, %v2452
      %v2455 = vshll.u32 %v2433, 16
      %v2457 = vrot.slane %v2455, 1
      %v2458 = vsel %vm277, %v2453, %v2457
      %v2459 = vshrl.u32 %v2433, 16
      %v2461 = vor.u32 %v2459, %v2457
      %v2463 = vshll.u32 %v2434, 16
      %v2465 = vrot.slane %v2463, 1
      %v2466 = vsel %vm277, %v2461, %v2465
      %v2467 = vshrl.u32 %v2434, 16
      %v2469 = vor.u32 %v2467, %v2465
      %v2471 = vshll.u32 %v2435, 16
      %v2473 = vrot.slane %v2471, 1
      %v2474 = vsel %vm277, %v2469, %v2473
      %v2475 = vshrl.u32 %v2435, 16
      %v2477 = vor.u32 %v2475, %v2473
      %v2479 = vshll.u32 %v2436, 16
      %v2481 = vrot.slane %v2479, 1
      %v2482 = vsel %vm277, %v2477, %v2481
      %v2483 = vshrl.u32 %v2436, 16
      %v2485 = vor.u32 %v2483, %v2481
      %v2487 = vshll.u32 %v2437, 16
      %v2489 = vrot.slane %v2487, 1
      %v2490 = vsel %vm277, %v2485, %v2489
      %v2491 = vshrl.u32 %v2437, 16
      %v2493 = vor.u32 %v2491, %v2489
      %v2495 = vshll.u32 %v2438, 16
      %v2497 = vrot.slane %v2495, 1
      %v2498 = vsel %vm277, %v2493, %v2497
      %v2499 = vshrl.u32 %v2438, 16
      %v2501 = vor.u32 %v2499, %v2497
      %v2503 = vshll.u32 %v2439, 16
      %v2505 = vrot.slane %v2503, 1
      %v2506 = vsel %vm277, %v2501, %v2505
      %v2507 = vshrl.u32 %v2439, 16
      %v2509 = vor.u32 %v2507, %v2505
      %v2511 = vshll.u32 %v2440, 16
      %v2513 = vrot.slane %v2511, 1
      %v2514 = vsel %vm277, %v2509, %v2513
      %v2515 = vshrl.u32 %v2440, 16
      %v2517 = vor.u32 %v2515, %v2513
      %v2519 = vshll.u32 %v2441, 16
      %v2521 = vrot.slane %v2519, 1
      %v2522 = vsel %vm277, %v2517, %v2521
      %v2523 = vshrl.u32 %v2441, 16
      %v2525 = vor.u32 %v2523, %v2521
      %v2527 = vshll.u32 %v2442, 16
      %v2529 = vrot.slane %v2527, 1
      %v2530 = vsel %vm277, %v2525, %v2529
      %v2531 = vshrl.u32 %v2442, 16
      %v2533 = vor.u32 %v2531, %v2529
      %v2535 = vshll.u32 %v2443, 16
      %v2537 = vrot.slane %v2535, 1
      %v2538 = vsel %vm277, %v2533, %v2537
      %v2539 = vshrl.u32 %v2443, 16
      %v2541 = vor.u32 %v2539, %v2537
      %v2543 = vshll.u32 %v2444, 16
      %v2545 = vrot.slane %v2543, 1
      %v2546 = vsel %vm277, %v2541, %v2545
      %v2547 = vshrl.u32 %v2444, 16
      %v2549 = vor.u32 %v2547, %v2545
      %v2551 = vshll.u32 %v2445, 16
      %v2553 = vrot.slane %v2551, 1
      %v2554 = vsel %vm277, %v2549, %v2553
      %v2555 = vshrl.u32 %v2445, 16
      %v2557 = vor.u32 %v2555, %v2553
      %v2559 = vshll.u32 %v2446, 16
      %v2561 = vrot.slane %v2559, 1
      %v2562 = vsel %vm277, %v2557, %v2561
      %v2564 = vsel %vm394, %v2458, 0
      %v2567 = vsel %vm394, %v2466, 0
      %v2570 = vsel %vm394, %v2474, 0
      %v2573 = vsel %vm394, %v2482, 0
      %v2576 = vsel %vm394, %v2490, 0
      %v2579 = vsel %vm394, %v2498, 0
      %v2582 = vsel %vm394, %v2506, 0
      %v2585 = vsel %vm394, %v2514, 0
      %v2588 = vsel %vm394, %v2522, 0
      %v2591 = vsel %vm394, %v2530, 0
      %v2594 = vsel %vm394, %v2538, 0
      %v2597 = vsel %vm394, %v2546, 0
      %v2600 = vsel %vm394, %v2554, 0
      %v2603 = vsel %vm394, %v2562, 0
      %v2606 = vsel %vm437, %v2373, 0
      %2608 = vmatprep.subr.bf16.mxu0 0
      %2609 = vmatpush1.bf16.msra.mxu0 0
      %2610 = vmatprep.subr.bf16.mxu0 0
      %2611 = vmatpush1.bf16.msra.mxu0 0
      %2612 = vmatprep.subr.bf16.mxu0 0
      %2613 = vmatpush1.bf16.msra.mxu0 0
      %2614 = vmatprep.subr.bf16.mxu0 0
      %2615 = vmatpush1.bf16.msra.mxu0 0
      %2616 = vmatprep.subr.bf16.mxu0 0
      %2617 = vmatpush1.bf16.msra.mxu0 0
      %2618 = vmatprep.subr.bf16.mxu0 0
      %2619 = vmatpush1.bf16.msra.mxu0 0
      %2620 = vmatprep.subr.bf16.mxu0 0
      %2621 = vmatpush1.bf16.msra.mxu0 0
      %2622 = vmatprep.subr.bf16.mxu0 0
      %2623 = vmatpush1.bf16.msra.mxu0 %v2606
      %2624 = vmatprep.subr.bf16.mxu0 0
      %2625 = vmatpush2.bf16.msra.mxu0 0
      %2626 = vmatprep.subr.bf16.mxu0 0
      %2627 = vmatpush2.bf16.msra.mxu0 0
      %2628 = vmatprep.subr.bf16.mxu0 0
      %2629 = vmatpush2.bf16.msra.mxu0 0
      %2630 = vmatprep.subr.bf16.mxu0 0
      %2631 = vmatpush2.bf16.msra.mxu0 0
      %2632 = vmatprep.subr.bf16.mxu0 0
      %2633 = vmatpush2.bf16.msra.mxu0 0
      %2634 = vmatprep.subr.bf16.mxu0 0
      %2635 = vmatpush2.bf16.msra.mxu0 0
      %2636 = vmatprep.subr.bf16.mxu0 0
      %2637 = vmatpush2.bf16.msra.mxu0 0
      %2638 = vmatprep.subr.bf16.mxu0 0
      %2639 = vmatpush2.bf16.msra.mxu0 0
      %2640 = vmatprep.mubr.bf16.mxu0 0
      %2641 = vmatmul.mubr.bf16.gmra.mxu0 %v2564
      %v2642 = vpop.f32.mrf.mxu0
      %v2643 = vadd.f32 0.0, %v2642
      %v2644 = vpop.f32.mrf.mxu0
      %v2645 = vpop.f32.mrf.mxu0
      %v2646 = vadd.f32 0.0, %v2645
      %v2647 = vpop.f32.mrf.mxu0
      %2648 = vmatprep.mubr.bf16.mxu0 0
      %2649 = vmatmul.mubr.bf16.gmra.mxu0 %v2567
      %v2650 = vpop.f32.mrf.mxu0
      %v2651 = vadd.f32 0.0, %v2650
      %v2652 = vpop.f32.mrf.mxu0
      %v2653 = vpop.f32.mrf.mxu0
      %v2654 = vadd.f32 0.0, %v2653
      %v2655 = vpop.f32.mrf.mxu0
      %2656 = vmatprep.mubr.bf16.mxu0 0
      %2657 = vmatmul.mubr.bf16.gmra.mxu0 %v2570
      %v2658 = vpop.f32.mrf.mxu0
      %v2659 = vadd.f32 0.0, %v2658
      %v2660 = vpop.f32.mrf.mxu0
      %v2661 = vpop.f32.mrf.mxu0
      %v2662 = vadd.f32 0.0, %v2661
      %v2663 = vpop.f32.mrf.mxu0
      %2664 = vmatprep.mubr.bf16.mxu0 0
      %2665 = vmatmul.mubr.bf16.gmra.mxu0 %v2573
      %v2666 = vpop.f32.mrf.mxu0
      %v2667 = vadd.f32 0.0, %v2666
      %v2668 = vpop.f32.mrf.mxu0
      %v2669 = vpop.f32.mrf.mxu0
      %v2670 = vadd.f32 0.0, %v2669
      %v2671 = vpop.f32.mrf.mxu0
      %2672 = vmatprep.mubr.bf16.mxu0 0
      %2673 = vmatmul.mubr.bf16.gmra.mxu0 %v2576
      %v2674 = vpop.f32.mrf.mxu0
      %v2675 = vadd.f32 0.0, %v2674
      %v2676 = vpop.f32.mrf.mxu0
      %v2677 = vpop.f32.mrf.mxu0
      %v2678 = vadd.f32 0.0, %v2677
      %v2679 = vpop.f32.mrf.mxu0
      %2680 = vmatprep.mubr.bf16.mxu0 0
      %2681 = vmatmul.mubr.bf16.gmra.mxu0 %v2579
      %v2682 = vpop.f32.mrf.mxu0
      %v2683 = vadd.f32 0.0, %v2682
      %v2684 = vpop.f32.mrf.mxu0
      %v2685 = vpop.f32.mrf.mxu0
      %v2686 = vadd.f32 0.0, %v2685
      %v2687 = vpop.f32.mrf.mxu0
      %2688 = vmatprep.mubr.bf16.mxu0 0
      %2689 = vmatmul.mubr.bf16.gmra.mxu0 %v2582
      %v2690 = vpop.f32.mrf.mxu0
      %v2691 = vadd.f32 0.0, %v2690
      %v2692 = vpop.f32.mrf.mxu0
      %v2693 = vpop.f32.mrf.mxu0
      %v2694 = vadd.f32 0.0, %v2693
      %v2695 = vpop.f32.mrf.mxu0
      %2696 = vmatprep.mubr.bf16.mxu0 0
      %2697 = vmatmul.mubr.bf16.gmra.mxu0 %v2585
      %v2698 = vpop.f32.mrf.mxu0
      %v2699 = vadd.f32 0.0, %v2698
      %v2700 = vpop.f32.mrf.mxu0
      %v2701 = vpop.f32.mrf.mxu0
      %v2702 = vadd.f32 0.0, %v2701
      %v2703 = vpop.f32.mrf.mxu0
      %2704 = vmatprep.mubr.bf16.mxu0 0
      %2705 = vmatmul.mubr.bf16.gmra.mxu0 %v2588
      %v2706 = vpop.f32.mrf.mxu0
      %v2707 = vadd.f32 0.0, %v2706
      %v2708 = vpop.f32.mrf.mxu0
      %v2709 = vpop.f32.mrf.mxu0
      %v2710 = vadd.f32 0.0, %v2709
      %v2711 = vpop.f32.mrf.mxu0
      %2712 = vmatprep.mubr.bf16.mxu0 0
      %2713 = vmatmul.mubr.bf16.gmra.mxu0 %v2591
      %v2714 = vpop.f32.mrf.mxu0
      %v2715 = vadd.f32 0.0, %v2714
      %v2716 = vpop.f32.mrf.mxu0
      %v2717 = vpop.f32.mrf.mxu0
      %v2718 = vadd.f32 0.0, %v2717
      %v2719 = vpop.f32.mrf.mxu0
      %2720 = vmatprep.mubr.bf16.mxu0 0
      %2721 = vmatmul.mubr.bf16.gmra.mxu0 %v2594
      %v2722 = vpop.f32.mrf.mxu0
      %v2723 = vadd.f32 0.0, %v2722
      %v2724 = vpop.f32.mrf.mxu0
      %v2725 = vpop.f32.mrf.mxu0
      %v2726 = vadd.f32 0.0, %v2725
      %v2727 = vpop.f32.mrf.mxu0
      %2728 = vmatprep.mubr.bf16.mxu0 0
      %2729 = vmatmul.mubr.bf16.gmra.mxu0 %v2597
      %v2730 = vpop.f32.mrf.mxu0
      %v2731 = vadd.f32 0.0, %v2730
      %v2732 = vpop.f32.mrf.mxu0
      %v2733 = vpop.f32.mrf.mxu0
      %v2734 = vadd.f32 0.0, %v2733
      %v2735 = vpop.f32.mrf.mxu0
      %2736 = vmatprep.mubr.bf16.mxu0 0
      %2737 = vmatmul.mubr.bf16.gmra.mxu0 %v2600
      %v2738 = vpop.f32.mrf.mxu0
      %v2739 = vadd.f32 0.0, %v2738
      %v2740 = vpop.f32.mrf.mxu0
      %v2741 = vpop.f32.mrf.mxu0
      %v2742 = vadd.f32 0.0, %v2741
      %v2743 = vpop.f32.mrf.mxu0
      %2744 = vmatprep.mubr.bf16.mxu0 0
      %2745 = vmatmul.mubr.bf16.gmra.mxu0 %v2603
      %v2746 = vpop.f32.mrf.mxu0
      %v2747 = vadd.f32 0.0, %v2746
      %v2748 = vpop.f32.mrf.mxu0
      %v2749 = vpop.f32.mrf.mxu0
      %v2750 = vadd.f32 0.0, %v2749
      %v2751 = vpop.f32.mrf.mxu0
      %2752 = vdwg.mxu0
      %v2753 = vadd.f32 %v2315, %v2643
      %v2754 = vadd.f32 %v2316, %v2646
      %v2755 = vadd.f32 %v2317, %v2651
      %v2756 = vadd.f32 %v2318, %v2654
      %v2757 = vadd.f32 %v2319, %v2659
      %v2758 = vadd.f32 %v2320, %v2662
      %v2759 = vadd.f32 %v2321, %v2667
      %v2760 = vadd.f32 %v2322, %v2670
      %v2761 = vadd.f32 %v2323, %v2675
      %v2762 = vadd.f32 %v2324, %v2678
      %v2763 = vadd.f32 %v2325, %v2683
      %v2764 = vadd.f32 %v2326, %v2686
      %v2765 = vadd.f32 %v2327, %v2691
      %v2766 = vadd.f32 %v2328, %v2694
      %v2767 = vadd.f32 %v2329, %v2699
      %v2768 = vadd.f32 %v2330, %v2702
      %v2769 = vadd.f32 %v2331, %v2707
      %v2770 = vadd.f32 %v2332, %v2710
      %v2771 = vadd.f32 %v2333, %v2715
      %v2772 = vadd.f32 %v2334, %v2718
      %v2773 = vadd.f32 %v2335, %v2723
      %v2774 = vadd.f32 %v2336, %v2726
      %v2775 = vadd.f32 %v2337, %v2731
      %v2776 = vadd.f32 %v2338, %v2734
      %v2777 = vadd.f32 %v2339, %v2739
      %v2778 = vadd.f32 %v2340, %v2742
      %v2779 = vadd.f32 %v2341, %v2747
      %v2780 = vadd.f32 %v2342, %v2750
      %v2781 = vld [vmem:[%s165 + $0x10] sm:$0xe]
      %s2782 = scalar_lea.vmem %s1, 16
      %v2783 = vld [vmem:[%s2782] sm:$0x3]
      %v2785 = vunpack.c.l.b16 %v2781
      %v2786 = vpack.c.b16 %v2404, %v2785
      %v2787 = vrot.slane %v2786, 1
      %v2788 = vrot.slane %v2433, 1
      %v2789 = vsel %vm768, %v2787, %v2788
      %v2790 = vrot.slane %v2434, 1
      %v2791 = vsel %vm768, %v2788, %v2790
      %v2792 = vrot.slane %v2435, 1
      %v2793 = vsel %vm768, %v2790, %v2792
      %v2794 = vrot.slane %v2436, 1
      %v2795 = vsel %vm768, %v2792, %v2794
      %v2796 = vrot.slane %v2437, 1
      %v2797 = vsel %vm768, %v2794, %v2796
      %v2798 = vrot.slane %v2438, 1
      %v2799 = vsel %vm768, %v2796, %v2798
      %v2800 = vrot.slane %v2439, 1
      %v2801 = vsel %vm768, %v2798, %v2800
      %v2802 = vrot.slane %v2440, 1
      %v2803 = vsel %vm768, %v2800, %v2802
      %v2804 = vrot.slane %v2441, 1
      %v2805 = vsel %vm768, %v2802, %v2804
      %v2806 = vrot.slane %v2442, 1
      %v2807 = vsel %vm768, %v2804, %v2806
      %v2808 = vrot.slane %v2443, 1
      %v2809 = vsel %vm768, %v2806, %v2808
      %v2810 = vrot.slane %v2444, 1
      %v2811 = vsel %vm768, %v2808, %v2810
      %v2812 = vrot.slane %v2445, 1
      %v2813 = vsel %vm768, %v2810, %v2812
      %v2814 = vrot.slane %v2446, 1
      %v2815 = vsel %vm768, %v2812, %v2814
      %v2817 = vsel %vm394, %v2789, 0
      %v2820 = vsel %vm394, %v2791, 0
      %v2823 = vsel %vm394, %v2793, 0
      %v2826 = vsel %vm394, %v2795, 0
      %v2829 = vsel %vm394, %v2797, 0
      %v2832 = vsel %vm394, %v2799, 0
      %v2835 = vsel %vm394, %v2801, 0
      %v2838 = vsel %vm394, %v2803, 0
      %v2841 = vsel %vm394, %v2805, 0
      %v2844 = vsel %vm394, %v2807, 0
      %v2847 = vsel %vm394, %v2809, 0
      %v2850 = vsel %vm394, %v2811, 0
      %v2853 = vsel %vm394, %v2813, 0
      %v2856 = vsel %vm394, %v2815, 0
      %v2859 = vsel %vm437, %v2783, 0
      %2861 = vmatprep.subr.bf16.mxu0 0
      %2862 = vmatpush1.bf16.msra.mxu0 0
      %2863 = vmatprep.subr.bf16.mxu0 0
      %2864 = vmatpush1.bf16.msra.mxu0 0
      %2865 = vmatprep.subr.bf16.mxu0 0
      %2866 = vmatpush1.bf16.msra.mxu0 0
      %2867 = vmatprep.subr.bf16.mxu0 0
      %2868 = vmatpush1.bf16.msra.mxu0 0
      %2869 = vmatprep.subr.bf16.mxu0 0
      %2870 = vmatpush1.bf16.msra.mxu0 0
      %2871 = vmatprep.subr.bf16.mxu0 0
      %2872 = vmatpush1.bf16.msra.mxu0 0
      %2873 = vmatprep.subr.bf16.mxu0 0
      %2874 = vmatpush1.bf16.msra.mxu0 0
      %2875 = vmatprep.subr.bf16.mxu0 0
      %2876 = vmatpush1.bf16.msra.mxu0 %v2859
      %2877 = vmatprep.subr.bf16.mxu0 0
      %2878 = vmatpush2.bf16.msra.mxu0 0
      %2879 = vmatprep.subr.bf16.mxu0 0
      %2880 = vmatpush2.bf16.msra.mxu0 0
      %2881 = vmatprep.subr.bf16.mxu0 0
      %2882 = vmatpush2.bf16.msra.mxu0 0
      %2883 = vmatprep.subr.bf16.mxu0 0
      %2884 = vmatpush2.bf16.msra.mxu0 0
      %2885 = vmatprep.subr.bf16.mxu0 0
      %2886 = vmatpush2.bf16.msra.mxu0 0
      %2887 = vmatprep.subr.bf16.mxu0 0
      %2888 = vmatpush2.bf16.msra.mxu0 0
      %2889 = vmatprep.subr.bf16.mxu0 0
      %2890 = vmatpush2.bf16.msra.mxu0 0
      %2891 = vmatprep.subr.bf16.mxu0 0
      %2892 = vmatpush2.bf16.msra.mxu0 0
      %2893 = vmatprep.mubr.bf16.mxu0 0
      %2894 = vmatmul.mubr.bf16.gmra.mxu0 %v2817
      %v2895 = vpop.f32.mrf.mxu0
      %v2896 = vadd.f32 0.0, %v2895
      %v2897 = vpop.f32.mrf.mxu0
      %v2898 = vpop.f32.mrf.mxu0
      %v2899 = vadd.f32 0.0, %v2898
      %v2900 = vpop.f32.mrf.mxu0
      %2901 = vmatprep.mubr.bf16.mxu0 0
      %2902 = vmatmul.mubr.bf16.gmra.mxu0 %v2820
      %v2903 = vpop.f32.mrf.mxu0
      %v2904 = vadd.f32 0.0, %v2903
      %v2905 = vpop.f32.mrf.mxu0
      %v2906 = vpop.f32.mrf.mxu0
      %v2907 = vadd.f32 0.0, %v2906
      %v2908 = vpop.f32.mrf.mxu0
      %2909 = vmatprep.mubr.bf16.mxu0 0
      %2910 = vmatmul.mubr.bf16.gmra.mxu0 %v2823
      %v2911 = vpop.f32.mrf.mxu0
      %v2912 = vadd.f32 0.0, %v2911
      %v2913 = vpop.f32.mrf.mxu0
      %v2914 = vpop.f32.mrf.mxu0
      %v2915 = vadd.f32 0.0, %v2914
      %v2916 = vpop.f32.mrf.mxu0
      %2917 = vmatprep.mubr.bf16.mxu0 0
      %2918 = vmatmul.mubr.bf16.gmra.mxu0 %v2826
      %v2919 = vpop.f32.mrf.mxu0
      %v2920 = vadd.f32 0.0, %v2919
      %v2921 = vpop.f32.mrf.mxu0
      %v2922 = vpop.f32.mrf.mxu0
      %v2923 = vadd.f32 0.0, %v2922
      %v2924 = vpop.f32.mrf.mxu0
      %2925 = vmatprep.mubr.bf16.mxu0 0
      %2926 = vmatmul.mubr.bf16.gmra.mxu0 %v2829
      %v2927 = vpop.f32.mrf.mxu0
      %v2928 = vadd.f32 0.0, %v2927
      %v2929 = vpop.f32.mrf.mxu0
      %v2930 = vpop.f32.mrf.mxu0
      %v2931 = vadd.f32 0.0, %v2930
      %v2932 = vpop.f32.mrf.mxu0
      %2933 = vmatprep.mubr.bf16.mxu0 0
      %2934 = vmatmul.mubr.bf16.gmra.mxu0 %v2832
      %v2935 = vpop.f32.mrf.mxu0
      %v2936 = vadd.f32 0.0, %v2935
      %v2937 = vpop.f32.mrf.mxu0
      %v2938 = vpop.f32.mrf.mxu0
      %v2939 = vadd.f32 0.0, %v2938
      %v2940 = vpop.f32.mrf.mxu0
      %2941 = vmatprep.mubr.bf16.mxu0 0
      %2942 = vmatmul.mubr.bf16.gmra.mxu0 %v2835
      %v2943 = vpop.f32.mrf.mxu0
      %v2944 = vadd.f32 0.0, %v2943
      %v2945 = vpop.f32.mrf.mxu0
      %v2946 = vpop.f32.mrf.mxu0
      %v2947 = vadd.f32 0.0, %v2946
      %v2948 = vpop.f32.mrf.mxu0
      %2949 = vmatprep.mubr.bf16.mxu0 0
      %2950 = vmatmul.mubr.bf16.gmra.mxu0 %v2838
      %v2951 = vpop.f32.mrf.mxu0
      %v2952 = vadd.f32 0.0, %v2951
      %v2953 = vpop.f32.mrf.mxu0
      %v2954 = vpop.f32.mrf.mxu0
      %v2955 = vadd.f32 0.0, %v2954
      %v2956 = vpop.f32.mrf.mxu0
      %2957 = vmatprep.mubr.bf16.mxu0 0
      %2958 = vmatmul.mubr.bf16.gmra.mxu0 %v2841
      %v2959 = vpop.f32.mrf.mxu0
      %v2960 = vadd.f32 0.0, %v2959
      %v2961 = vpop.f32.mrf.mxu0
      %v2962 = vpop.f32.mrf.mxu0
      %v2963 = vadd.f32 0.0, %v2962
      %v2964 = vpop.f32.mrf.mxu0
      %2965 = vmatprep.mubr.bf16.mxu0 0
      %2966 = vmatmul.mubr.bf16.gmra.mxu0 %v2844
      %v2967 = vpop.f32.mrf.mxu0
      %v2968 = vadd.f32 0.0, %v2967
      %v2969 = vpop.f32.mrf.mxu0
      %v2970 = vpop.f32.mrf.mxu0
      %v2971 = vadd.f32 0.0, %v2970
      %v2972 = vpop.f32.mrf.mxu0
      %2973 = vmatprep.mubr.bf16.mxu0 0
      %2974 = vmatmul.mubr.bf16.gmra.mxu0 %v2847
      %v2975 = vpop.f32.mrf.mxu0
      %v2976 = vadd.f32 0.0, %v2975
      %v2977 = vpop.f32.mrf.mxu0
      %v2978 = vpop.f32.mrf.mxu0
      %v2979 = vadd.f32 0.0, %v2978
      %v2980 = vpop.f32.mrf.mxu0
      %2981 = vmatprep.mubr.bf16.mxu0 0
      %2982 = vmatmul.mubr.bf16.gmra.mxu0 %v2850
      %v2983 = vpop.f32.mrf.mxu0
      %v2984 = vadd.f32 0.0, %v2983
      %v2985 = vpop.f32.mrf.mxu0
      %v2986 = vpop.f32.mrf.mxu0
      %v2987 = vadd.f32 0.0, %v2986
      %v2988 = vpop.f32.mrf.mxu0
      %2989 = vmatprep.mubr.bf16.mxu0 0
      %2990 = vmatmul.mubr.bf16.gmra.mxu0 %v2853
      %v2991 = vpop.f32.mrf.mxu0
      %v2992 = vadd.f32 0.0, %v2991
      %v2993 = vpop.f32.mrf.mxu0
      %v2994 = vpop.f32.mrf.mxu0
      %v2995 = vadd.f32 0.0, %v2994
      %v2996 = vpop.f32.mrf.mxu0
      %2997 = vmatprep.mubr.bf16.mxu0 0
      %2998 = vmatmul.mubr.bf16.gmra.mxu0 %v2856
      %v2999 = vpop.f32.mrf.mxu0
      %v3000 = vadd.f32 0.0, %v2999
      %v3001 = vpop.f32.mrf.mxu0
      %v3002 = vpop.f32.mrf.mxu0
      %v3003 = vadd.f32 0.0, %v3002
      %v3004 = vpop.f32.mrf.mxu0
      %3005 = vdwg.mxu0
      %v3006 = vadd.f32 %v2753, %v2896
      %v3007 = vadd.f32 %v2754, %v2899
      %v3008 = vadd.f32 %v2755, %v2904
      %v3009 = vadd.f32 %v2756, %v2907
      %v3010 = vadd.f32 %v2757, %v2912
      %v3011 = vadd.f32 %v2758, %v2915
      %v3012 = vadd.f32 %v2759, %v2920
      %v3013 = vadd.f32 %v2760, %v2923
      %v3014 = vadd.f32 %v2761, %v2928
      %v3015 = vadd.f32 %v2762, %v2931
      %v3016 = vadd.f32 %v2763, %v2936
      %v3017 = vadd.f32 %v2764, %v2939
      %v3018 = vadd.f32 %v2765, %v2944
      %v3019 = vadd.f32 %v2766, %v2947
      %v3020 = vadd.f32 %v2767, %v2952
      %v3021 = vadd.f32 %v2768, %v2955
      %v3022 = vadd.f32 %v2769, %v2960
      %v3023 = vadd.f32 %v2770, %v2963
      %v3024 = vadd.f32 %v2771, %v2968
      %v3025 = vadd.f32 %v2772, %v2971
      %v3026 = vadd.f32 %v2773, %v2976
      %v3027 = vadd.f32 %v2774, %v2979
      %v3028 = vadd.f32 %v2775, %v2984
      %v3029 = vadd.f32 %v2776, %v2987
      %v3030 = vadd.f32 %v2777, %v2992
      %v3031 = vadd.f32 %v2778, %v2995
      %v3032 = vadd.f32 %v2779, %v3000
      %v3033 = vadd.f32 %v2780, %v3003
      %v3034 = vld [vmem:[%s2] sm:$0x1]
      %v3036 = vlaneseq
      %v3037 = vshrl.u32 %v3036, 7
      %v3038 = vsub.s32 0, %v3037
      %v3039 = vrot.slane %v3034, %v3038
      %v3041 = vadd.f32 %v3006, %v3039
      %v3042 = vadd.f32 %v3007, %v3039
      %v3043 = vadd.f32 %v3008, %v3039
      %v3044 = vadd.f32 %v3009, %v3039
      %v3045 = vadd.f32 %v3010, %v3039
      %v3046 = vadd.f32 %v3011, %v3039
      %v3047 = vadd.f32 %v3012, %v3039
      %v3048 = vadd.f32 %v3013, %v3039
      %v3049 = vadd.f32 %v3014, %v3039
      %v3050 = vadd.f32 %v3015, %v3039
      %v3051 = vadd.f32 %v3016, %v3039
      %v3052 = vadd.f32 %v3017, %v3039
      %v3053 = vadd.f32 %v3018, %v3039
      %v3054 = vadd.f32 %v3019, %v3039
      %v3055 = vadd.f32 %v3020, %v3039
      %v3056 = vadd.f32 %v3021, %v3039
      %v3057 = vadd.f32 %v3022, %v3039
      %v3058 = vadd.f32 %v3023, %v3039
      %v3059 = vadd.f32 %v3024, %v3039
      %v3060 = vadd.f32 %v3025, %v3039
      %v3061 = vadd.f32 %v3026, %v3039
      %v3062 = vadd.f32 %v3027, %v3039
      %v3063 = vadd.f32 %v3028, %v3039
      %v3064 = vadd.f32 %v3029, %v3039
      %v3065 = vadd.f32 %v3030, %v3039
      %v3066 = vadd.f32 %v3031, %v3039
      %v3067 = vadd.f32 %v3032, %v3039
      %v3068 = vadd.f32 %v3033, %v3039
      %v3069 = vmax.f32 %v3041, 0.0
      %v3070 = vmax.f32 %v3042, 0.0
      %v3071 = vmax.f32 %v3043, 0.0
      %v3072 = vmax.f32 %v3044, 0.0
      %v3073 = vmax.f32 %v3045, 0.0
      %v3074 = vmax.f32 %v3046, 0.0
      %v3075 = vmax.f32 %v3047, 0.0
      %v3076 = vmax.f32 %v3048, 0.0
      %v3077 = vmax.f32 %v3049, 0.0
      %v3078 = vmax.f32 %v3050, 0.0
      %v3079 = vmax.f32 %v3051, 0.0
      %v3080 = vmax.f32 %v3052, 0.0
      %v3081 = vmax.f32 %v3053, 0.0
      %v3082 = vmax.f32 %v3054, 0.0
      %v3083 = vmax.f32 %v3055, 0.0
      %v3084 = vmax.f32 %v3056, 0.0
      %v3085 = vmax.f32 %v3057, 0.0
      %v3086 = vmax.f32 %v3058, 0.0
      %v3087 = vmax.f32 %v3059, 0.0
      %v3088 = vmax.f32 %v3060, 0.0
      %v3089 = vmax.f32 %v3061, 0.0
      %v3090 = vmax.f32 %v3062, 0.0
      %v3091 = vmax.f32 %v3063, 0.0
      %v3092 = vmax.f32 %v3064, 0.0
      %v3093 = vmax.f32 %v3065, 0.0
      %v3094 = vmax.f32 %v3066, 0.0
      %v3095 = vmax.f32 %v3067, 0.0
      %v3096 = vmax.f32 %v3068, 0.0
      %v3097 = vpack.c.bf16 %v3070, %v3069
      %v3098 = vpack.c.bf16 %v3072, %v3071
      %v3099 = vpack.c.bf16 %v3074, %v3073
      %v3100 = vpack.c.bf16 %v3076, %v3075
      %v3101 = vpack.c.bf16 %v3078, %v3077
      %v3102 = vpack.c.bf16 %v3080, %v3079
      %v3103 = vpack.c.bf16 %v3082, %v3081
      %v3104 = vpack.c.bf16 %v3084, %v3083
      %v3105 = vpack.c.bf16 %v3086, %v3085
      %v3106 = vpack.c.bf16 %v3088, %v3087
      %v3107 = vpack.c.bf16 %v3090, %v3089
      %v3108 = vpack.c.bf16 %v3092, %v3091
      %v3109 = vpack.c.bf16 %v3094, %v3093
      %v3110 = vpack.c.bf16 %v3096, %v3095
      %v3125 = vunpack.c.l.b16 %v3097
      %v3126 = vunpack.c.h.b16 %v3097
      %v3127 = vunpack.c.l.b16 %v3098
      %v3128 = vunpack.c.h.b16 %v3098
      %v3129 = vunpack.c.l.b16 %v3099
      %v3130 = vunpack.c.h.b16 %v3099
      %v3131 = vunpack.c.l.b16 %v3100
      %v3132 = vunpack.c.h.b16 %v3100
      %v3133 = vunpack.c.l.b16 %v3101
      %v3134 = vunpack.c.h.b16 %v3101
      %v3135 = vunpack.c.l.b16 %v3102
      %v3136 = vunpack.c.h.b16 %v3102
      %v3137 = vunpack.c.l.b16 %v3103
      %v3138 = vunpack.c.h.b16 %v3103
      %v3139 = vunpack.c.l.b16 %v3104
      %v3140 = vunpack.c.h.b16 %v3104
      %v3141 = vunpack.c.l.b16 %v3105
      %v3142 = vunpack.c.h.b16 %v3105
      %v3143 = vunpack.c.l.b16 %v3106
      %v3144 = vunpack.c.h.b16 %v3106
      %v3145 = vunpack.c.l.b16 %v3107
      %v3146 = vunpack.c.h.b16 %v3107
      %v3147 = vunpack.c.l.b16 %v3108
      %v3148 = vunpack.c.h.b16 %v3108
      %v3149 = vunpack.c.l.b16 %v3109
      %v3150 = vunpack.c.h.b16 %v3109
      %v3151 = vunpack.c.l.b16 %v3110
      %v3152 = vunpack.c.h.b16 %v3110
      %v3153 = vpack.c.b16 %v3125, %v3125
      %v3154 = vpack.c.b16 %v3126, %v3126
      %v3155 = vpack.c.b16 %v3127, %v3127
      %v3156 = vpack.c.b16 %v3128, %v3128
      %v3157 = vpack.c.b16 %v3129, %v3129
      %v3158 = vpack.c.b16 %v3130, %v3130
      %v3159 = vpack.c.b16 %v3131, %v3131
      %v3160 = vpack.c.b16 %v3132, %v3132
      %v3161 = vpack.c.b16 %v3133, %v3133
      %v3162 = vpack.c.b16 %v3134, %v3134
      %v3163 = vpack.c.b16 %v3135, %v3135
      %v3164 = vpack.c.b16 %v3136, %v3136
      %v3165 = vpack.c.b16 %v3137, %v3137
      %v3166 = vpack.c.b16 %v3138, %v3138
      %v3167 = vpack.c.b16 %v3139, %v3139
      %v3168 = vpack.c.b16 %v3140, %v3140
      %v3169 = vpack.c.b16 %v3141, %v3141
      %v3170 = vpack.c.b16 %v3142, %v3142
      %v3171 = vpack.c.b16 %v3143, %v3143
      %v3172 = vpack.c.b16 %v3144, %v3144
      %v3173 = vpack.c.b16 %v3145, %v3145
      %v3174 = vpack.c.b16 %v3146, %v3146
      %v3175 = vpack.c.b16 %v3147, %v3147
      %v3176 = vpack.c.b16 %v3148, %v3148
      %v3177 = vpack.c.b16 %v3149, %v3149
      %v3178 = vpack.c.b16 %v3150, %v3150
      %v3179 = vpack.c.b16 %v3151, %v3151
      %v3180 = vpack.c.b16 %v3152, %v3152
      %vm3209 = vcmask 60416
      %3210 = vst.msk [vmem:[%s170] sm:$0xf] %vm3209, %v3153
      %3211 = vst.msk [vmem:[%s170 + $0x4] sm:$0xf] %vm3209, %v3154
      %3212 = vst.msk [vmem:[%s170 + $0x8] sm:$0xf] %vm3209, %v3155
      %3213 = vst.msk [vmem:[%s170 + $0xc] sm:$0xf] %vm3209, %v3156
      %3214 = vst.msk [vmem:[%s170 + $0x10] sm:$0xf] %vm3209, %v3157
      %3215 = vst.msk [vmem:[%s170 + $0x14] sm:$0xf] %vm3209, %v3158
      %3216 = vst.msk [vmem:[%s170 + $0x18] sm:$0xf] %vm3209, %v3159
      %3217 = vst.msk [vmem:[%s170 + $0x1c] sm:$0xf] %vm3209, %v3160
      %3218 = vst.msk [vmem:[%s170 + $0x20] sm:$0xf] %vm3209, %v3161
      %3219 = vst.msk [vmem:[%s170 + $0x24] sm:$0xf] %vm3209, %v3162
      %3220 = vst.msk [vmem:[%s170 + $0x28] sm:$0xf] %vm3209, %v3163
      %3221 = vst.msk [vmem:[%s170 + $0x2c] sm:$0xf] %vm3209, %v3164
      %3222 = vst.msk [vmem:[%s170 + $0x30] sm:$0xf] %vm3209, %v3165
      %3223 = vst.msk [vmem:[%s170 + $0x34] sm:$0xf] %vm3209, %v3166
      %3224 = vst.msk [vmem:[%s170 + $0x38] sm:$0xf] %vm3209, %v3167
      %3225 = vst.msk [vmem:[%s170 + $0x3c] sm:$0xf] %vm3209, %v3168
      %3226 = vst.msk [vmem:[%s170 + $0x40] sm:$0xf] %vm3209, %v3169
      %3227 = vst.msk [vmem:[%s170 + $0x44] sm:$0xf] %vm3209, %v3170
      %3228 = vst.msk [vmem:[%s170 + $0x48] sm:$0xf] %vm3209, %v3171
      %3229 = vst.msk [vmem:[%s170 + $0x4c] sm:$0xf] %vm3209, %v3172
      %3230 = vst.msk [vmem:[%s170 + $0x50] sm:$0xf] %vm3209, %v3173
      %3231 = vst.msk [vmem:[%s170 + $0x54] sm:$0xf] %vm3209, %v3174
      %3232 = vst.msk [vmem:[%s170 + $0x58] sm:$0xf] %vm3209, %v3175
      %3233 = vst.msk [vmem:[%s170 + $0x5c] sm:$0xf] %vm3209, %v3176
      %3234 = vst.msk [vmem:[%s170 + $0x60] sm:$0xf] %vm3209, %v3177
      %3235 = vst.msk [vmem:[%s170 + $0x64] sm:$0xf] %vm3209, %v3178
      %3236 = vst.msk [vmem:[%s170 + $0x68] sm:$0xf] %vm3209, %v3179
      %3237 = vst.msk [vmem:[%s170 + $0x6c] sm:$0xf] %vm3209, %v3180
      %p3238 = scmp.lt.s32.totalorder %s14, 1
      %s3239 = scalar_select %p3238, %s14, 1
      %s3240 = smul.addr %s3239, 28
      %s3241 = smul.addr %s3240, 4
      %s3242 = scalar_lea.vmem %s3, %s3241
      // Predicated region
      $region33: #{tpu_custom_call.1} parent=31 // pred_check
        %p3243 = pneg %p100
      $region34: #{tpu_custom_call.1} parent=31 // pred_check_branch
        %3245 = sbr.rel (%p3243) target = $region36
      $region35: #{tpu_custom_call.1} parent=31 // pred_region
        _
      $region36: #{tpu_custom_call.1} parent=31 // pred_fallthru
        _
    $region32: #{tpu_custom_call.1} parent=5 // pred_fallthru
      _
    %p3246 = scmp.le.s32.totalorder 2, %s9
    // Predicated region
    $region37: #{tpu_custom_call.1} parent=5 // pred_check
      %p3247 = pneg %p3246
    $region38: #{tpu_custom_call.1} parent=5 // pred_check_branch
      %3249 = sbr.rel (%p3247) target = $region40
    $region39: #{tpu_custom_call.1} parent=5 // pred_region
      %s3250 = ssub.s32 %s9, 2
      // Predicated region
      $region41: #{tpu_custom_call.1} parent=39 // pred_check
        %p3251 = pneg %p106
      $region42: #{tpu_custom_call.1} parent=39 // pred_check_branch
        %3253 = sbr.rel (%p3251) target = $region44
      $region43: #{tpu_custom_call.1} parent=39 // pred_region
        %p3254 = scmp.lt.s32.totalorder %s15, 1
        %s3255 = scalar_select %p3254, %s15, 1
        %s3256 = smul.addr %s3255, 28
        %s3257 = smul.addr %s3256, 4
        %s3258 = scalar_lea.vmem %s3, %s3257
      $region44: #{tpu_custom_call.1} parent=39 // pred_fallthru
        _
    $region40: #{tpu_custom_call.1} parent=5 // pred_fallthru
      _
  $region6: #{tpu_custom_call.1} parent=0 // loop_footer
    %s13 = sadd.s32 1, %s9
  $region7: #{tpu_custom_call.1} parent=0 // loop_footer_branch
    %8 = sbr.rel target = $region3
  $region8: #{tpu_custom_call.1} parent=0 // loop_exit
    _

</llo_original>
